<compile_context>
chip_gen: v7x
topology: tpu7x:2x2x1
jax: 0.10.0
libtpu: 0.0.40
codegen_flags: <defaults>
</compile_context>

<pallas_src>
import functools

import jax
import jax.numpy as jnp
from jax import lax
from jax.experimental import pallas as pl
from jax.experimental.pallas import tpu as pltpu

LANE = 128      # vreg lane width
SUBLANE = 8     # vreg sublane count (f32)


def _round_up(x, m):
    return (x + m - 1) // m * m


def rnn_proj_kernel(x_ref, wih_ref, whh_ref, bias_ref,
                    lnw_ref, lnb_ref, pw_ref, pb_ref,
                    o_ref, seq_scr, *, real_size):
    """Single-invocation kernel: multi-layer tanh RNN + LayerNorm + Linear.

    x_ref    : (seq, B, S)      embedded inputs, time-major, zero-padded
    wih_ref  : (depth, S, S)    W_ih.T per layer (pre-transposed in wrapper)
    whh_ref  : (depth, S, S)    W_hh.T per layer
    bias_ref : (depth, 1, S)    b_ih + b_hh per layer
    lnw_ref  : (1, S)           LayerNorm weight (zero-padded)
    lnb_ref  : (1, S)           LayerNorm bias   (zero-padded)
    pw_ref   : (S, S)           Linear weight packed into column 0
    pb_ref   : (1, S)           Linear bias packed into column 0
    o_ref    : (B, S)           output; column 0 holds the real result
    seq_scr  : VMEM (seq, B, S) layer pre-activations / layer outputs
    """
    seq, bpad, spad = seq_scr.shape
    depth = wih_ref.shape[0]

    h = jnp.zeros((bpad, spad), jnp.float32)

    for l in range(depth):                       # depth is small and static
        whh_t = whh_ref[l]                       # (S, S), already transposed
        last = (l == depth - 1)

        # Hoisted input projection: one MXU call covers every timestep.
        xin = x_ref[...] if l == 0 else seq_scr[...]
        pre = jnp.dot(xin.reshape(seq * bpad, spad), wih_ref[l],
                      preferred_element_type=jnp.float32) + bias_ref[l]
        seq_scr[...] = pre.reshape(seq, bpad, spad)

        # Serial recurrence: only h @ W_hh.T + tanh sits on the critical path.
        def step(t, h, _last=last, _whh=whh_t):
            h_new = jnp.tanh(
                seq_scr[t]
                + jnp.dot(h, _whh, preferred_element_type=jnp.float32))
            if not _last:                        # last layer only needs h_T
                seq_scr[t] = h_new
            return h_new

        h = lax.fori_loop(0, seq, step, jnp.zeros_like(h), unroll=True)

    # LayerNorm over the real (unpadded) feature width.  Padded lanes of h are
    # exactly zero (padded weight rows / bias lanes are zero), so plain sums
    # over the padded width divided by real_size are exact.
    inv_n = 1.0 / float(real_size)
    mean = jnp.sum(h, axis=-1, keepdims=True) * inv_n
    var = jnp.sum(h * h, axis=-1, keepdims=True) * inv_n - mean * mean
    ln = (h - mean) * lax.rsqrt(var + 1e-5) * lnw_ref[...] + lnb_ref[...]

    # Linear(size, 1): weight lives in column 0 of a lane-dense (S, S) matrix,
    # keeping the output store full-lane width (no masked vst).
    o_ref[...] = (jnp.dot(ln, pw_ref[...], preferred_element_type=jnp.float32)
                  + pb_ref[...])


def model_forward(inp, params):
    """inp: (batch, seq, 1) int32 of 0/1 tokens. Returns (batch, 1) float32."""
    emb = params["embed"]                       # (2, size)
    size = emb.shape[1]
    depth = params["w_ih"].shape[0]
    batch, seq = inp.shape[0], inp.shape[1]

    S = _round_up(size, LANE)                   # lane-dense feature width
    B = _round_up(batch, SUBLANE)               # sublane-aligned batch

    # Glue: transpose(0,1).squeeze(-1).long() -> embedding lookup (time-major).
    idx = inp[..., 0].astype(jnp.int32)         # (batch, seq)
    x = jnp.transpose(emb[idx], (1, 0, 2))      # (seq, batch, size)
    x = jnp.pad(x, ((0, 0), (0, B - batch), (0, S - size)))

    # Pre-transpose weights (x @ W.T -> x @ W_t), fold the two RNN biases into
    # one tensor, and zero-pad everything to aligned tiles (trace-time, free).
    wih_t = jnp.pad(jnp.transpose(params["w_ih"], (0, 2, 1)),
                    ((0, 0), (0, S - size), (0, S - size)))
    whh_t = jnp.pad(jnp.transpose(params["w_hh"], (0, 2, 1)),
                    ((0, 0), (0, S - size), (0, S - size)))
    bias = jnp.pad(params["b_ih"] + params["b_hh"],
                   ((0, 0), (0, 0), (0, S - size)))              # (depth, 1, S)
    ln_w = jnp.pad(params["ln_w"], ((0, 0), (0, S - size)))      # (1, S)
    ln_b = jnp.pad(params["ln_b"], ((0, 0), (0, S - size)))      # (1, S)
    pw_t = jnp.pad(params["proj_w"].T, ((0, S - size), (0, S - 1)))  # (S, S)
    pb = jnp.pad(params["proj_b"], ((0, 0), (0, S - 1)))             # (1, S)

    grid_spec = pltpu.PrefetchScalarGridSpec(
        num_scalar_prefetch=0,
        grid=(1,),                                   # single invocation
        in_specs=[
            pl.BlockSpec((seq, B, S), lambda i: (0, 0, 0)),     # x
            pl.BlockSpec((depth, S, S), lambda i: (0, 0, 0)),   # W_ih.T stack
            pl.BlockSpec((depth, S, S), lambda i: (0, 0, 0)),   # W_hh.T stack
            pl.BlockSpec((depth, 1, S), lambda i: (0, 0, 0)),   # folded bias
            pl.BlockSpec((1, S), lambda i: (0, 0)),             # ln_w
            pl.BlockSpec((1, S), lambda i: (0, 0)),             # ln_b
            pl.BlockSpec((S, S), lambda i: (0, 0)),             # proj_w.T (packed)
            pl.BlockSpec((1, S), lambda i: (0, 0)),             # proj_b (packed)
        ],
        out_specs=pl.BlockSpec((B, S), lambda i: (0, 0)),
        scratch_shapes=[pltpu.VMEM((seq, B, S), jnp.float32)],  # layer sequence
    )

    out = pl.pallas_call(
        functools.partial(rnn_proj_kernel, real_size=size),
        out_shape=jax.ShapeDtypeStruct((B, S), jnp.float32),
        grid_spec=grid_spec,
        compiler_params=pltpu.CompilerParams(
            dimension_semantics=("arbitrary",)),
    )(x, wih_t, whh_t, bias, ln_w, ln_b, pw_t, pb)

    return out[:batch, :1]


def ref_forward(inp, params):
    """Pure-JAX reference mirroring the PyTorch forward pass."""
    emb = params["embed"]
    x = emb[inp[..., 0].astype(jnp.int32)]
    x = jnp.transpose(x, (1, 0, 2))             # (seq, batch, size)
    seq, batch, size = x.shape
    depth = params["w_ih"].shape[0]
    layer_in = x
    for l in range(depth):
        h = jnp.zeros((batch, size), jnp.float32)
        outs = []
        for t in range(seq):
            h = jnp.tanh(layer_in[t] @ params["w_ih"][l].T + params["b_ih"][l]
                         + h @ params["w_hh"][l].T + params["b_hh"][l])
            outs.append(h)
        layer_in = jnp.stack(outs)
    h_last = layer_in[-1]
    mean = h_last.mean(-1, keepdims=True)
    var = ((h_last - mean) ** 2).mean(-1, keepdims=True)
    ln = (h_last - mean) / jnp.sqrt(var + 1e-5) * params["ln_w"] + params["ln_b"]
    return ln @ params["proj_w"].T + params["proj_b"]


def init_params(key, size, depth):
    ks = jax.random.split(key, 8)
    scale = 1.0 / jnp.sqrt(size)
    return {
        "embed": jax.random.normal(ks[0], (2, size), jnp.float32),
        "w_ih": jax.random.uniform(ks[1], (depth, size, size), jnp.float32,
                                   -scale, scale),
        "w_hh": jax.random.uniform(ks[2], (depth, size, size), jnp.float32,
                                   -scale, scale),
        "b_ih": jax.random.uniform(ks[3], (depth, 1, size), jnp.float32,
                                   -scale, scale),
        "b_hh": jax.random.uniform(ks[4], (depth, 1, size), jnp.float32,
                                   -scale, scale),
        "ln_w": jnp.ones((1, size), jnp.float32),
        "ln_b": jnp.zeros((1, size), jnp.float32),
        "proj_w": jax.random.uniform(ks[5], (1, size), jnp.float32,
                                     -scale, scale),
        "proj_b": jax.random.uniform(ks[6], (1, 1), jnp.float32,
                                     -scale, scale),
    }


if __name__ == "__main__":
    size, depth = 32, 2
    batch, seq = 2, 8

    key = jax.random.PRNGKey(0)
    k_inp, k_par = jax.random.split(key)
    params = init_params(k_par, size, depth)

    # Binary token inputs, shape (batch, seq, 1) like the PyTorch module expects.
    inp = jax.random.bernoulli(k_inp, 0.5, (batch, seq, 1)).astype(jnp.int32)

    out = model_forward(inp, params)
    out = jax.block_until_ready(out)

    ref = jax.block_until_ready(ref_forward(inp, params))
    assert out.shape == (batch, 1)
    assert jnp.allclose(out, ref, atol=2e-3, rtol=2e-3), (out, ref)

    print("KERNEL_OK")
</pallas_src>

<mosaic_0001>
module attributes {stable_mosaic.version = 11 : i64} {
  func.func @rnn_proj_kernel(%arg0: i32, %arg1: memref<8x8x128xf32, #tpu.memory_space<vmem>>, %arg2: memref<2x128x128xf32, #tpu.memory_space<vmem>>, %arg3: memref<2x128x128xf32, #tpu.memory_space<vmem>>, %arg4: memref<2x1x128xf32, #tpu.memory_space<vmem>>, %arg5: memref<1x128xf32, #tpu.memory_space<vmem>>, %arg6: memref<1x128xf32, #tpu.memory_space<vmem>>, %arg7: memref<128x128xf32, #tpu.memory_space<vmem>>, %arg8: memref<1x128xf32, #tpu.memory_space<vmem>>, %arg9: memref<8x128xf32, #tpu.memory_space<vmem>>, %arg10: memref<8x8x128xf32, #tpu.memory_space<vmem>>) attributes {dimension_semantics = [#tpu.dimension_semantics<arbitrary>], iteration_bounds = array<i64: 1>, scalar_prefetch = 0 : i64, scratch_operands = 1 : i64, tpu.core_type = #tpu.core_type<tc>, window_params = [{pipeline_mode = #tpu.pipeline_mode<synchronous>, transform_indices = @transform_0, window_bounds = array<i64: 8, 8, 128>}, {pipeline_mode = #tpu.pipeline_mode<synchronous>, transform_indices = @transform_1, window_bounds = array<i64: 2, 128, 128>}, {pipeline_mode = #tpu.pipeline_mode<synchronous>, transform_indices = @transform_2, window_bounds = array<i64: 2, 128, 128>}, {pipeline_mode = #tpu.pipeline_mode<synchronous>, transform_indices = @transform_3, window_bounds = array<i64: 2, 1, 128>}, {pipeline_mode = #tpu.pipeline_mode<synchronous>, transform_indices = @transform_4, window_bounds = array<i64: 1, 128>}, {pipeline_mode = #tpu.pipeline_mode<synchronous>, transform_indices = @transform_5, window_bounds = array<i64: 1, 128>}, {pipeline_mode = #tpu.pipeline_mode<synchronous>, transform_indices = @transform_6, window_bounds = array<i64: 128, 128>}, {pipeline_mode = #tpu.pipeline_mode<synchronous>, transform_indices = @transform_7, window_bounds = array<i64: 1, 128>}, {pipeline_mode = #tpu.pipeline_mode<synchronous>, transform_indices = @transform_8, window_bounds = array<i64: 8, 128>}]} {
    %c0 = arith.constant 0 : index
    %c0_0 = arith.constant 0 : index
    %c0_1 = arith.constant 0 : index
    %0 = vector.load %arg3[%c0, %c0_0, %c0_1] : memref<2x128x128xf32, #tpu.memory_space<vmem>>, vector<1x128x128xf32>
    %1 = vector.shape_cast %0 : vector<1x128x128xf32> to vector<128x128xf32>
    %c0_2 = arith.constant 0 : index
    %c0_3 = arith.constant 0 : index
    %c0_4 = arith.constant 0 : index
    %2 = vector.load %arg1[%c0_2, %c0_3, %c0_4] : memref<8x8x128xf32, #tpu.memory_space<vmem>>, vector<8x8x128xf32>
    %3 = vector.shape_cast %2 : vector<8x8x128xf32> to vector<64x128xf32>
    %c0_5 = arith.constant 0 : index
    %c0_6 = arith.constant 0 : index
    %c0_7 = arith.constant 0 : index
    %4 = vector.load %arg2[%c0_5, %c0_6, %c0_7] : memref<2x128x128xf32, #tpu.memory_space<vmem>>, vector<1x128x128xf32>
    %5 = vector.shape_cast %4 : vector<1x128x128xf32> to vector<128x128xf32>
    %cst = arith.constant dense<0.000000e+00> : vector<64x128xf32>
    %6 = tpu.matmul %3, %5, %cst {dimension_numbers = #tpu.dot_dimension_numbers<[1], [0], [0], [1], [0, 0, 1, 1], [], []>} : vector<64x128xf32>, vector<128x128xf32>, vector<64x128xf32> -> vector<64x128xf32>
    %c0_8 = arith.constant 0 : index
    %c0_9 = arith.constant 0 : index
    %c0_10 = arith.constant 0 : index
    %7 = vector.load %arg4[%c0_8, %c0_9, %c0_10] : memref<2x1x128xf32, #tpu.memory_space<vmem>>, vector<1x1x128xf32>
    %8 = vector.shape_cast %7 : vector<1x1x128xf32> to vector<1x128xf32>
    %9 = vector.broadcast %8 : vector<1x128xf32> to vector<64x128xf32>
    %10 = arith.addf %6, %9 : vector<64x128xf32>
    %11 = vector.shape_cast %10 : vector<64x128xf32> to vector<8x8x128xf32>
    %c0_11 = arith.constant 0 : index
    %c0_12 = arith.constant 0 : index
    %c0_13 = arith.constant 0 : index
    %12 = vector.load %arg10[%c0_11, %c0_12, %c0_13] : memref<8x8x128xf32, #tpu.memory_space<vmem>>, vector<8x8x128xf32>
    tpu.vector_store %arg10[%c0_11, %c0_12, %c0_13], %11 {strides = array<i32>} : memref<8x8x128xf32, #tpu.memory_space<vmem>>, vector<8x8x128xf32>,
    %cst_14 = arith.constant 0.000000e+00 : f32
    %13 = vector.broadcast %cst_14 : f32 to vector<8x128xf32>
    %c0_i32 = arith.constant 0 : i32
    %14 = arith.index_cast %c0_i32 : i32 to index
    %c0_15 = arith.constant 0 : index
    %c0_16 = arith.constant 0 : index
    %15 = vector.load %arg10[%14, %c0_15, %c0_16] : memref<8x8x128xf32, #tpu.memory_space<vmem>>, vector<1x8x128xf32>
    %16 = vector.shape_cast %15 : vector<1x8x128xf32> to vector<8x128xf32>
    %cst_17 = arith.constant dense<0.000000e+00> : vector<8x128xf32>
    %17 = tpu.matmul %13, %1, %cst_17 {dimension_numbers = #tpu.dot_dimension_numbers<[1], [0], [0], [1], [0, 0, 1, 1], [], []>} : vector<8x128xf32>, vector<128x128xf32>, vector<8x128xf32> -> vector<8x128xf32>
    %18 = arith.addf %16, %17 : vector<8x128xf32>
    %19 = math.tanh %18 : vector<8x128xf32>
    %20 = arith.index_cast %c0_i32 : i32 to index
    %c0_18 = arith.constant 0 : index
    %c0_19 = arith.constant 0 : index
    %21 = vector.load %arg10[%20, %c0_18, %c0_19] : memref<8x8x128xf32, #tpu.memory_space<vmem>>, vector<1x8x128xf32>
    %22 = vector.shape_cast %21 : vector<1x8x128xf32> to vector<8x128xf32>
    %23 = vector.shape_cast %19 : vector<8x128xf32> to vector<1x8x128xf32>
    tpu.vector_store %arg10[%20, %c0_18, %c0_19], %23 {strides = array<i32>} : memref<8x8x128xf32, #tpu.memory_space<vmem>>, vector<1x8x128xf32>,
    %c1_i32 = arith.constant 1 : i32
    %24 = arith.index_cast %c1_i32 : i32 to index
    %c0_20 = arith.constant 0 : index
    %c0_21 = arith.constant 0 : index
    %25 = vector.load %arg10[%24, %c0_20, %c0_21] : memref<8x8x128xf32, #tpu.memory_space<vmem>>, vector<1x8x128xf32>
    %26 = vector.shape_cast %25 : vector<1x8x128xf32> to vector<8x128xf32>
    %cst_22 = arith.constant dense<0.000000e+00> : vector<8x128xf32>
    %27 = tpu.matmul %19, %1, %cst_22 {dimension_numbers = #tpu.dot_dimension_numbers<[1], [0], [0], [1], [0, 0, 1, 1], [], []>} : vector<8x128xf32>, vector<128x128xf32>, vector<8x128xf32> -> vector<8x128xf32>
    %28 = arith.addf %26, %27 : vector<8x128xf32>
    %29 = math.tanh %28 : vector<8x128xf32>
    %30 = arith.index_cast %c1_i32 : i32 to index
    %c0_23 = arith.constant 0 : index
    %c0_24 = arith.constant 0 : index
    %31 = vector.load %arg10[%30, %c0_23, %c0_24] : memref<8x8x128xf32, #tpu.memory_space<vmem>>, vector<1x8x128xf32>
    %32 = vector.shape_cast %31 : vector<1x8x128xf32> to vector<8x128xf32>
    %33 = vector.shape_cast %29 : vector<8x128xf32> to vector<1x8x128xf32>
    tpu.vector_store %arg10[%30, %c0_23, %c0_24], %33 {strides = array<i32>} : memref<8x8x128xf32, #tpu.memory_space<vmem>>, vector<1x8x128xf32>,
    %c2_i32 = arith.constant 2 : i32
    %34 = arith.index_cast %c2_i32 : i32 to index
    %c0_25 = arith.constant 0 : index
    %c0_26 = arith.constant 0 : index
    %35 = vector.load %arg10[%34, %c0_25, %c0_26] : memref<8x8x128xf32, #tpu.memory_space<vmem>>, vector<1x8x128xf32>
    %36 = vector.shape_cast %35 : vector<1x8x128xf32> to vector<8x128xf32>
    %cst_27 = arith.constant dense<0.000000e+00> : vector<8x128xf32>
    %37 = tpu.matmul %29, %1, %cst_27 {dimension_numbers = #tpu.dot_dimension_numbers<[1], [0], [0], [1], [0, 0, 1, 1], [], []>} : vector<8x128xf32>, vector<128x128xf32>, vector<8x128xf32> -> vector<8x128xf32>
    %38 = arith.addf %36, %37 : vector<8x128xf32>
    %39 = math.tanh %38 : vector<8x128xf32>
    %40 = arith.index_cast %c2_i32 : i32 to index
    %c0_28 = arith.constant 0 : index
    %c0_29 = arith.constant 0 : index
    %41 = vector.load %arg10[%40, %c0_28, %c0_29] : memref<8x8x128xf32, #tpu.memory_space<vmem>>, vector<1x8x128xf32>
    %42 = vector.shape_cast %41 : vector<1x8x128xf32> to vector<8x128xf32>
    %43 = vector.shape_cast %39 : vector<8x128xf32> to vector<1x8x128xf32>
    tpu.vector_store %arg10[%40, %c0_28, %c0_29], %43 {strides = array<i32>} : memref<8x8x128xf32, #tpu.memory_space<vmem>>, vector<1x8x128xf32>,
    %c3_i32 = arith.constant 3 : i32
    %44 = arith.index_cast %c3_i32 : i32 to index
    %c0_30 = arith.constant 0 : index
    %c0_31 = arith.constant 0 : index
    %45 = vector.load %arg10[%44, %c0_30, %c0_31] : memref<8x8x128xf32, #tpu.memory_space<vmem>>, vector<1x8x128xf32>
    %46 = vector.shape_cast %45 : vector<1x8x128xf32> to vector<8x128xf32>
    %cst_32 = arith.constant dense<0.000000e+00> : vector<8x128xf32>
    %47 = tpu.matmul %39, %1, %cst_32 {dimension_numbers = #tpu.dot_dimension_numbers<[1], [0], [0], [1], [0, 0, 1, 1], [], []>} : vector<8x128xf32>, vector<128x128xf32>, vector<8x128xf32> -> vector<8x128xf32>
    %48 = arith.addf %46, %47 : vector<8x128xf32>
    %49 = math.tanh %48 : vector<8x128xf32>
    %50 = arith.index_cast %c3_i32 : i32 to index
    %c0_33 = arith.constant 0 : index
    %c0_34 = arith.constant 0 : index
    %51 = vector.load %arg10[%50, %c0_33, %c0_34] : memref<8x8x128xf32, #tpu.memory_space<vmem>>, vector<1x8x128xf32>
    %52 = vector.shape_cast %51 : vector<1x8x128xf32> to vector<8x128xf32>
    %53 = vector.shape_cast %49 : vector<8x128xf32> to vector<1x8x128xf32>
    tpu.vector_store %arg10[%50, %c0_33, %c0_34], %53 {strides = array<i32>} : memref<8x8x128xf32, #tpu.memory_space<vmem>>, vector<1x8x128xf32>,
    %c4_i32 = arith.constant 4 : i32
    %54 = arith.index_cast %c4_i32 : i32 to index
    %c0_35 = arith.constant 0 : index
    %c0_36 = arith.constant 0 : index
    %55 = vector.load %arg10[%54, %c0_35, %c0_36] : memref<8x8x128xf32, #tpu.memory_space<vmem>>, vector<1x8x128xf32>
    %56 = vector.shape_cast %55 : vector<1x8x128xf32> to vector<8x128xf32>
    %cst_37 = arith.constant dense<0.000000e+00> : vector<8x128xf32>
    %57 = tpu.matmul %49, %1, %cst_37 {dimension_numbers = #tpu.dot_dimension_numbers<[1], [0], [0], [1], [0, 0, 1, 1], [], []>} : vector<8x128xf32>, vector<128x128xf32>, vector<8x128xf32> -> vector<8x128xf32>
    %58 = arith.addf %56, %57 : vector<8x128xf32>
    %59 = math.tanh %58 : vector<8x128xf32>
    %60 = arith.index_cast %c4_i32 : i32 to index
    %c0_38 = arith.constant 0 : index
    %c0_39 = arith.constant 0 : index
    %61 = vector.load %arg10[%60, %c0_38, %c0_39] : memref<8x8x128xf32, #tpu.memory_space<vmem>>, vector<1x8x128xf32>
    %62 = vector.shape_cast %61 : vector<1x8x128xf32> to vector<8x128xf32>
    %63 = vector.shape_cast %59 : vector<8x128xf32> to vector<1x8x128xf32>
    tpu.vector_store %arg10[%60, %c0_38, %c0_39], %63 {strides = array<i32>} : memref<8x8x128xf32, #tpu.memory_space<vmem>>, vector<1x8x128xf32>,
    %c5_i32 = arith.constant 5 : i32
    %64 = arith.index_cast %c5_i32 : i32 to index
    %c0_40 = arith.constant 0 : index
    %c0_41 = arith.constant 0 : index
    %65 = vector.load %arg10[%64, %c0_40, %c0_41] : memref<8x8x128xf32, #tpu.memory_space<vmem>>, vector<1x8x128xf32>
    %66 = vector.shape_cast %65 : vector<1x8x128xf32> to vector<8x128xf32>
    %cst_42 = arith.constant dense<0.000000e+00> : vector<8x128xf32>
    %67 = tpu.matmul %59, %1, %cst_42 {dimension_numbers = #tpu.dot_dimension_numbers<[1], [0], [0], [1], [0, 0, 1, 1], [], []>} : vector<8x128xf32>, vector<128x128xf32>, vector<8x128xf32> -> vector<8x128xf32>
    %68 = arith.addf %66, %67 : vector<8x128xf32>
    %69 = math.tanh %68 : vector<8x128xf32>
    %70 = arith.index_cast %c5_i32 : i32 to index
    %c0_43 = arith.constant 0 : index
    %c0_44 = arith.constant 0 : index
    %71 = vector.load %arg10[%70, %c0_43, %c0_44] : memref<8x8x128xf32, #tpu.memory_space<vmem>>, vector<1x8x128xf32>
    %72 = vector.shape_cast %71 : vector<1x8x128xf32> to vector<8x128xf32>
    %73 = vector.shape_cast %69 : vector<8x128xf32> to vector<1x8x128xf32>
    tpu.vector_store %arg10[%70, %c0_43, %c0_44], %73 {strides = array<i32>} : memref<8x8x128xf32, #tpu.memory_space<vmem>>, vector<1x8x128xf32>,
    %c6_i32 = arith.constant 6 : i32
    %74 = arith.index_cast %c6_i32 : i32 to index
    %c0_45 = arith.constant 0 : index
    %c0_46 = arith.constant 0 : index
    %75 = vector.load %arg10[%74, %c0_45, %c0_46] : memref<8x8x128xf32, #tpu.memory_space<vmem>>, vector<1x8x128xf32>
    %76 = vector.shape_cast %75 : vector<1x8x128xf32> to vector<8x128xf32>
    %cst_47 = arith.constant dense<0.000000e+00> : vector<8x128xf32>
    %77 = tpu.matmul %69, %1, %cst_47 {dimension_numbers = #tpu.dot_dimension_numbers<[1], [0], [0], [1], [0, 0, 1, 1], [], []>} : vector<8x128xf32>, vector<128x128xf32>, vector<8x128xf32> -> vector<8x128xf32>
    %78 = arith.addf %76, %77 : vector<8x128xf32>
    %79 = math.tanh %78 : vector<8x128xf32>
    %80 = arith.index_cast %c6_i32 : i32 to index
    %c0_48 = arith.constant 0 : index
    %c0_49 = arith.constant 0 : index
    %81 = vector.load %arg10[%80, %c0_48, %c0_49] : memref<8x8x128xf32, #tpu.memory_space<vmem>>, vector<1x8x128xf32>
    %82 = vector.shape_cast %81 : vector<1x8x128xf32> to vector<8x128xf32>
    %83 = vector.shape_cast %79 : vector<8x128xf32> to vector<1x8x128xf32>
    tpu.vector_store %arg10[%80, %c0_48, %c0_49], %83 {strides = array<i32>} : memref<8x8x128xf32, #tpu.memory_space<vmem>>, vector<1x8x128xf32>,
    %c7_i32 = arith.constant 7 : i32
    %84 = arith.index_cast %c7_i32 : i32 to index
    %c0_50 = arith.constant 0 : index
    %c0_51 = arith.constant 0 : index
    %85 = vector.load %arg10[%84, %c0_50, %c0_51] : memref<8x8x128xf32, #tpu.memory_space<vmem>>, vector<1x8x128xf32>
    %86 = vector.shape_cast %85 : vector<1x8x128xf32> to vector<8x128xf32>
    %cst_52 = arith.constant dense<0.000000e+00> : vector<8x128xf32>
    %87 = tpu.matmul %79, %1, %cst_52 {dimension_numbers = #tpu.dot_dimension_numbers<[1], [0], [0], [1], [0, 0, 1, 1], [], []>} : vector<8x128xf32>, vector<128x128xf32>, vector<8x128xf32> -> vector<8x128xf32>
    %88 = arith.addf %86, %87 : vector<8x128xf32>
    %89 = math.tanh %88 : vector<8x128xf32>
    %90 = arith.index_cast %c7_i32 : i32 to index
    %c0_53 = arith.constant 0 : index
    %c0_54 = arith.constant 0 : index
    %91 = vector.load %arg10[%90, %c0_53, %c0_54] : memref<8x8x128xf32, #tpu.memory_space<vmem>>, vector<1x8x128xf32>
    %92 = vector.shape_cast %91 : vector<1x8x128xf32> to vector<8x128xf32>
    %93 = vector.shape_cast %89 : vector<8x128xf32> to vector<1x8x128xf32>
    tpu.vector_store %arg10[%90, %c0_53, %c0_54], %93 {strides = array<i32>} : memref<8x8x128xf32, #tpu.memory_space<vmem>>, vector<1x8x128xf32>,
    %c8_i32 = arith.constant 8 : i32
    %c1 = arith.constant 1 : index
    %c0_55 = arith.constant 0 : index
    %c0_56 = arith.constant 0 : index
    %94 = vector.load %arg3[%c1, %c0_55, %c0_56] : memref<2x128x128xf32, #tpu.memory_space<vmem>>, vector<1x128x128xf32>
    %95 = vector.shape_cast %94 : vector<1x128x128xf32> to vector<128x128xf32>
    %c0_57 = arith.constant 0 : index
    %c0_58 = arith.constant 0 : index
    %c0_59 = arith.constant 0 : index
    %96 = vector.load %arg10[%c0_57, %c0_58, %c0_59] : memref<8x8x128xf32, #tpu.memory_space<vmem>>, vector<8x8x128xf32>
    %97 = vector.shape_cast %96 : vector<8x8x128xf32> to vector<64x128xf32>
    %c1_60 = arith.constant 1 : index
    %c0_61 = arith.constant 0 : index
    %c0_62 = arith.constant 0 : index
    %98 = vector.load %arg2[%c1_60, %c0_61, %c0_62] : memref<2x128x128xf32, #tpu.memory_space<vmem>>, vector<1x128x128xf32>
    %99 = vector.shape_cast %98 : vector<1x128x128xf32> to vector<128x128xf32>
    %cst_63 = arith.constant dense<0.000000e+00> : vector<64x128xf32>
    %100 = tpu.matmul %97, %99, %cst_63 {dimension_numbers = #tpu.dot_dimension_numbers<[1], [0], [0], [1], [0, 0, 1, 1], [], []>} : vector<64x128xf32>, vector<128x128xf32>, vector<64x128xf32> -> vector<64x128xf32>
    %c1_64 = arith.constant 1 : index
    %c0_65 = arith.constant 0 : index
    %c0_66 = arith.constant 0 : index
    %101 = vector.load %arg4[%c1_64, %c0_65, %c0_66] : memref<2x1x128xf32, #tpu.memory_space<vmem>>, vector<1x1x128xf32>
    %102 = vector.shape_cast %101 : vector<1x1x128xf32> to vector<1x128xf32>
    %103 = vector.broadcast %102 : vector<1x128xf32> to vector<64x128xf32>
    %104 = arith.addf %100, %103 : vector<64x128xf32>
    %105 = vector.shape_cast %104 : vector<64x128xf32> to vector<8x8x128xf32>
    %c0_67 = arith.constant 0 : index
    %c0_68 = arith.constant 0 : index
    %c0_69 = arith.constant 0 : index
    %106 = vector.load %arg10[%c0_67, %c0_68, %c0_69] : memref<8x8x128xf32, #tpu.memory_space<vmem>>, vector<8x8x128xf32>
    tpu.vector_store %arg10[%c0_67, %c0_68, %c0_69], %105 {strides = array<i32>} : memref<8x8x128xf32, #tpu.memory_space<vmem>>, vector<8x8x128xf32>,
    %cst_70 = arith.constant 0.000000e+00 : f32
    %107 = vector.broadcast %cst_70 : f32 to vector<8x128xf32>
    %c0_i32_71 = arith.constant 0 : i32
    %108 = arith.index_cast %c0_i32_71 : i32 to index
    %c0_72 = arith.constant 0 : index
    %c0_73 = arith.constant 0 : index
    %109 = vector.load %arg10[%108, %c0_72, %c0_73] : memref<8x8x128xf32, #tpu.memory_space<vmem>>, vector<1x8x128xf32>
    %110 = vector.shape_cast %109 : vector<1x8x128xf32> to vector<8x128xf32>
    %cst_74 = arith.constant dense<0.000000e+00> : vector<8x128xf32>
    %111 = tpu.matmul %107, %95, %cst_74 {dimension_numbers = #tpu.dot_dimension_numbers<[1], [0], [0], [1], [0, 0, 1, 1], [], []>} : vector<8x128xf32>, vector<128x128xf32>, vector<8x128xf32> -> vector<8x128xf32>
    %112 = arith.addf %110, %111 : vector<8x128xf32>
    %113 = math.tanh %112 : vector<8x128xf32>
    %c1_i32_75 = arith.constant 1 : i32
    %114 = arith.index_cast %c1_i32_75 : i32 to index
    %c0_76 = arith.constant 0 : index
    %c0_77 = arith.constant 0 : index
    %115 = vector.load %arg10[%114, %c0_76, %c0_77] : memref<8x8x128xf32, #tpu.memory_space<vmem>>, vector<1x8x128xf32>
    %116 = vector.shape_cast %115 : vector<1x8x128xf32> to vector<8x128xf32>
    %cst_78 = arith.constant dense<0.000000e+00> : vector<8x128xf32>
    %117 = tpu.matmul %113, %95, %cst_78 {dimension_numbers = #tpu.dot_dimension_numbers<[1], [0], [0], [1], [0, 0, 1, 1], [], []>} : vector<8x128xf32>, vector<128x128xf32>, vector<8x128xf32> -> vector<8x128xf32>
    %118 = arith.addf %116, %117 : vector<8x128xf32>
    %119 = math.tanh %118 : vector<8x128xf32>
    %c2_i32_79 = arith.constant 2 : i32
    %120 = arith.index_cast %c2_i32_79 : i32 to index
    %c0_80 = arith.constant 0 : index
    %c0_81 = arith.constant 0 : index
    %121 = vector.load %arg10[%120, %c0_80, %c0_81] : memref<8x8x128xf32, #tpu.memory_space<vmem>>, vector<1x8x128xf32>
    %122 = vector.shape_cast %121 : vector<1x8x128xf32> to vector<8x128xf32>
    %cst_82 = arith.constant dense<0.000000e+00> : vector<8x128xf32>
    %123 = tpu.matmul %119, %95, %cst_82 {dimension_numbers = #tpu.dot_dimension_numbers<[1], [0], [0], [1], [0, 0, 1, 1], [], []>} : vector<8x128xf32>, vector<128x128xf32>, vector<8x128xf32> -> vector<8x128xf32>
    %124 = arith.addf %122, %123 : vector<8x128xf32>
    %125 = math.tanh %124 : vector<8x128xf32>
    %c3_i32_83 = arith.constant 3 : i32
    %126 = arith.index_cast %c3_i32_83 : i32 to index
    %c0_84 = arith.constant 0 : index
    %c0_85 = arith.constant 0 : index
    %127 = vector.load %arg10[%126, %c0_84, %c0_85] : memref<8x8x128xf32, #tpu.memory_space<vmem>>, vector<1x8x128xf32>
    %128 = vector.shape_cast %127 : vector<1x8x128xf32> to vector<8x128xf32>
    %cst_86 = arith.constant dense<0.000000e+00> : vector<8x128xf32>
    %129 = tpu.matmul %125, %95, %cst_86 {dimension_numbers = #tpu.dot_dimension_numbers<[1], [0], [0], [1], [0, 0, 1, 1], [], []>} : vector<8x128xf32>, vector<128x128xf32>, vector<8x128xf32> -> vector<8x128xf32>
    %130 = arith.addf %128, %129 : vector<8x128xf32>
    %131 = math.tanh %130 : vector<8x128xf32>
    %c4_i32_87 = arith.constant 4 : i32
    %132 = arith.index_cast %c4_i32_87 : i32 to index
    %c0_88 = arith.constant 0 : index
    %c0_89 = arith.constant 0 : index
    %133 = vector.load %arg10[%132, %c0_88, %c0_89] : memref<8x8x128xf32, #tpu.memory_space<vmem>>, vector<1x8x128xf32>
    %134 = vector.shape_cast %133 : vector<1x8x128xf32> to vector<8x128xf32>
    %cst_90 = arith.constant dense<0.000000e+00> : vector<8x128xf32>
    %135 = tpu.matmul %131, %95, %cst_90 {dimension_numbers = #tpu.dot_dimension_numbers<[1], [0], [0], [1], [0, 0, 1, 1], [], []>} : vector<8x128xf32>, vector<128x128xf32>, vector<8x128xf32> -> vector<8x128xf32>
    %136 = arith.addf %134, %135 : vector<8x128xf32>
    %137 = math.tanh %136 : vector<8x128xf32>
    %c5_i32_91 = arith.constant 5 : i32
    %138 = arith.index_cast %c5_i32_91 : i32 to index
    %c0_92 = arith.constant 0 : index
    %c0_93 = arith.constant 0 : index
    %139 = vector.load %arg10[%138, %c0_92, %c0_93] : memref<8x8x128xf32, #tpu.memory_space<vmem>>, vector<1x8x128xf32>
    %140 = vector.shape_cast %139 : vector<1x8x128xf32> to vector<8x128xf32>
    %cst_94 = arith.constant dense<0.000000e+00> : vector<8x128xf32>
    %141 = tpu.matmul %137, %95, %cst_94 {dimension_numbers = #tpu.dot_dimension_numbers<[1], [0], [0], [1], [0, 0, 1, 1], [], []>} : vector<8x128xf32>, vector<128x128xf32>, vector<8x128xf32> -> vector<8x128xf32>
    %142 = arith.addf %140, %141 : vector<8x128xf32>
    %143 = math.tanh %142 : vector<8x128xf32>
    %c6_i32_95 = arith.constant 6 : i32
    %144 = arith.index_cast %c6_i32_95 : i32 to index
    %c0_96 = arith.constant 0 : index
    %c0_97 = arith.constant 0 : index
    %145 = vector.load %arg10[%144, %c0_96, %c0_97] : memref<8x8x128xf32, #tpu.memory_space<vmem>>, vector<1x8x128xf32>
    %146 = vector.shape_cast %145 : vector<1x8x128xf32> to vector<8x128xf32>
    %cst_98 = arith.constant dense<0.000000e+00> : vector<8x128xf32>
    %147 = tpu.matmul %143, %95, %cst_98 {dimension_numbers = #tpu.dot_dimension_numbers<[1], [0], [0], [1], [0, 0, 1, 1], [], []>} : vector<8x128xf32>, vector<128x128xf32>, vector<8x128xf32> -> vector<8x128xf32>
    %148 = arith.addf %146, %147 : vector<8x128xf32>
    %149 = math.tanh %148 : vector<8x128xf32>
    %c7_i32_99 = arith.constant 7 : i32
    %150 = arith.index_cast %c7_i32_99 : i32 to index
    %c0_100 = arith.constant 0 : index
    %c0_101 = arith.constant 0 : index
    %151 = vector.load %arg10[%150, %c0_100, %c0_101] : memref<8x8x128xf32, #tpu.memory_space<vmem>>, vector<1x8x128xf32>
    %152 = vector.shape_cast %151 : vector<1x8x128xf32> to vector<8x128xf32>
    %cst_102 = arith.constant dense<0.000000e+00> : vector<8x128xf32>
    %153 = tpu.matmul %149, %95, %cst_102 {dimension_numbers = #tpu.dot_dimension_numbers<[1], [0], [0], [1], [0, 0, 1, 1], [], []>} : vector<8x128xf32>, vector<128x128xf32>, vector<8x128xf32> -> vector<8x128xf32>
    %154 = arith.addf %152, %153 : vector<8x128xf32>
    %155 = math.tanh %154 : vector<8x128xf32>
    %c8_i32_103 = arith.constant 8 : i32
    %cst_104 = arith.constant dense<0.000000e+00> : vector<8xf32>
    %156 = vector.multi_reduction <add>, %155, %cst_104 [1] : vector<8x128xf32> to vector<8xf32>
    %157 = vector.shape_cast %156 : vector<8xf32> to vector<8x1xf32>
    %cst_105 = arith.constant 3.125000e-02 : f32
    %158 = vector.broadcast %cst_105 : f32 to vector<8x1xf32>
    %159 = arith.mulf %157, %158 : vector<8x1xf32>
    %160 = arith.mulf %155, %155 : vector<8x128xf32>
    %cst_106 = arith.constant dense<0.000000e+00> : vector<8xf32>
    %161 = vector.multi_reduction <add>, %160, %cst_106 [1] : vector<8x128xf32> to vector<8xf32>
    %162 = vector.shape_cast %161 : vector<8xf32> to vector<8x1xf32>
    %cst_107 = arith.constant 3.125000e-02 : f32
    %163 = vector.broadcast %cst_107 : f32 to vector<8x1xf32>
    %164 = arith.mulf %162, %163 : vector<8x1xf32>
    %165 = arith.mulf %159, %159 : vector<8x1xf32>
    %166 = arith.subf %164, %165 : vector<8x1xf32>
    %167 = vector.broadcast %159 : vector<8x1xf32> to vector<8x128xf32>
    %168 = arith.subf %155, %167 : vector<8x128xf32>
    %cst_108 = arith.constant 9.99999974E-6 : f32
    %169 = vector.broadcast %cst_108 : f32 to vector<8x1xf32>
    %170 = arith.addf %166, %169 : vector<8x1xf32>
    %171 = math.rsqrt %170 : vector<8x1xf32>
    %172 = vector.broadcast %171 : vector<8x1xf32> to vector<8x128xf32>
    %173 = arith.mulf %168, %172 : vector<8x128xf32>
    %c0_109 = arith.constant 0 : index
    %c0_110 = arith.constant 0 : index
    %174 = vector.load %arg5[%c0_109, %c0_110] : memref<1x128xf32, #tpu.memory_space<vmem>>, vector<1x128xf32>
    %175 = vector.broadcast %174 : vector<1x128xf32> to vector<8x128xf32>
    %176 = arith.mulf %173, %175 : vector<8x128xf32>
    %c0_111 = arith.constant 0 : index
    %c0_112 = arith.constant 0 : index
    %177 = vector.load %arg6[%c0_111, %c0_112] : memref<1x128xf32, #tpu.memory_space<vmem>>, vector<1x128xf32>
    %178 = vector.broadcast %177 : vector<1x128xf32> to vector<8x128xf32>
    %179 = arith.addf %176, %178 : vector<8x128xf32>
    %c0_113 = arith.constant 0 : index
    %c0_114 = arith.constant 0 : index
    %180 = vector.load %arg7[%c0_113, %c0_114] : memref<128x128xf32, #tpu.memory_space<vmem>>, vector<128x128xf32>
    %cst_115 = arith.constant dense<0.000000e+00> : vector<8x128xf32>
    %181 = tpu.matmul %179, %180, %cst_115 {dimension_numbers = #tpu.dot_dimension_numbers<[1], [0], [0], [1], [0, 0, 1, 1], [], []>} : vector<8x128xf32>, vector<128x128xf32>, vector<8x128xf32> -> vector<8x128xf32>
    %c0_116 = arith.constant 0 : index
    %c0_117 = arith.constant 0 : index
    %182 = vector.load %arg8[%c0_116, %c0_117] : memref<1x128xf32, #tpu.memory_space<vmem>>, vector<1x128xf32>
    %183 = vector.broadcast %182 : vector<1x128xf32> to vector<8x128xf32>
    %184 = arith.addf %181, %183 : vector<8x128xf32>
    %c0_118 = arith.constant 0 : index
    %c0_119 = arith.constant 0 : index
    %185 = vector.load %arg9[%c0_118, %c0_119] : memref<8x128xf32, #tpu.memory_space<vmem>>, vector<8x128xf32>
    tpu.vector_store %arg9[%c0_118, %c0_119], %184 {strides = array<i32>} : memref<8x128xf32, #tpu.memory_space<vmem>>, vector<8x128xf32>,
    return
  }
  func.func @transform_0(%arg0: i32) -> (i32, i32, i32) {
    %c0_i32 = arith.constant 0 : i32
    %c0_i32_0 = arith.constant 0 : i32
    %c0_i32_1 = arith.constant 0 : i32
    %c0_i32_2 = arith.constant 0 : i32
    return %c0_i32, %c0_i32_0, %c0_i32_1 : i32, i32, i32
  }
  func.func @transform_1(%arg0: i32) -> (i32, i32, i32) {
    %c0_i32 = arith.constant 0 : i32
    %c0_i32_0 = arith.constant 0 : i32
    %c0_i32_1 = arith.constant 0 : i32
    %c0_i32_2 = arith.constant 0 : i32
    return %c0_i32, %c0_i32_0, %c0_i32_1 : i32, i32, i32
  }
  func.func @transform_2(%arg0: i32) -> (i32, i32, i32) {
    %c0_i32 = arith.constant 0 : i32
    %c0_i32_0 = arith.constant 0 : i32
    %c0_i32_1 = arith.constant 0 : i32
    %c0_i32_2 = arith.constant 0 : i32
    return %c0_i32, %c0_i32_0, %c0_i32_1 : i32, i32, i32
  }
  func.func @transform_3(%arg0: i32) -> (i32, i32, i32) {
    %c0_i32 = arith.constant 0 : i32
    %c0_i32_0 = arith.constant 0 : i32
    %c0_i32_1 = arith.constant 0 : i32
    %c0_i32_2 = arith.constant 0 : i32
    return %c0_i32, %c0_i32_0, %c0_i32_1 : i32, i32, i32
  }
  func.func @transform_4(%arg0: i32) -> (i32, i32) {
    %c0_i32 = arith.constant 0 : i32
    %c0_i32_0 = arith.constant 0 : i32
    %c0_i32_1 = arith.constant 0 : i32
    return %c0_i32, %c0_i32_0 : i32, i32
  }
  func.func @transform_5(%arg0: i32) -> (i32, i32) {
    %c0_i32 = arith.constant 0 : i32
    %c0_i32_0 = arith.constant 0 : i32
    %c0_i32_1 = arith.constant 0 : i32
    return %c0_i32, %c0_i32_0 : i32, i32
  }
  func.func @transform_6(%arg0: i32) -> (i32, i32) {
    %c0_i32 = arith.constant 0 : i32
    %c0_i32_0 = arith.constant 0 : i32
    %c0_i32_1 = arith.constant 0 : i32
    return %c0_i32, %c0_i32_0 : i32, i32
  }
  func.func @transform_7(%arg0: i32) -> (i32, i32) {
    %c0_i32 = arith.constant 0 : i32
    %c0_i32_0 = arith.constant 0 : i32
    %c0_i32_1 = arith.constant 0 : i32
    return %c0_i32, %c0_i32_0 : i32, i32
  }
  func.func @transform_8(%arg0: i32) -> (i32, i32) {
    %c0_i32 = arith.constant 0 : i32
    %c0_i32_0 = arith.constant 0 : i32
    %c0_i32_1 = arith.constant 0 : i32
    return %c0_i32, %c0_i32_0 : i32, i32
  }
}

</mosaic_0001>

<llo_original>
// kernel: tpu_custom_call.1
$region0: #{tpu_custom_call.1}
  #allocation0 [shape = 'u32[]', space=smem, size = 0x4, offset = 0x4, fixed_abs, tag = 'smem constant byte address 0x4 - core index']
  #allocation1 [shape = 'u32[144,128]{1,0:T(1,128)}', space=vmem, size = 0x12000, scoped, tag = 'internal scratch']
  #allocation2 [shape = 'f32[8,8,128]{2,1,0:T(8,128)}', space=vmem, size = 0x8000, scoped, tag = 'scratch operand']
  %s0 = inlined_call_operand.hbm [shape: f32[8,8,128], index: 0, kind: input, shape index: {}]
  %s1 = inlined_call_operand.hbm [shape: f32[2,128,128], index: 1, kind: input, shape index: {}]
  %s2 = inlined_call_operand.hbm [shape: f32[2,128,128], index: 2, kind: input, shape index: {}]
  %s3 = inlined_call_operand.vmem [shape: f32[2,1,128], index: 3, kind: input, shape index: {}]
  %s4 = inlined_call_operand.vmem [shape: f32[1,128], index: 4, kind: input, shape index: {}]
  %s5 = inlined_call_operand.vmem [shape: f32[1,128], index: 5, kind: input, shape index: {}]
  %s6 = inlined_call_operand.hbm [shape: f32[128,128], index: 6, kind: input, shape index: {}]
  %s7 = inlined_call_operand.vmem [shape: f32[1,128], index: 7, kind: input, shape index: {}]
  %s8 = inlined_call_operand.hbm [shape: f32[8,128], index: 8, kind: output, shape index: {}]
  %s9 = sld [smem:[#allocation0]]
  $region58: #{tpu_custom_call.1} parent=0
    _
  %s11 = ssub.s32 1, %s9
  %s12 = scalar_select 0, %s11, %s9
  $region1: #{tpu_custom_call.1} parent=0
    #allocation3 [shape = 'u8[32768]{0}', space=vmem, size = 0x8000, scoped, tag = 'input window, operand 0, single buffered']
    #allocation4 [shape = 's32[1]{0}', space=sflag, size = 0x4, scoped, tag = 'scoped memory for tpu_custom_call.1']
    #allocation5 [shape = 's32[1]{0}', space=sflag, size = 0x4, scoped, tag = 'scoped memory for tpu_custom_call.1']
    #allocation6 [shape = 'u8[131072]{0}', space=vmem, size = 0x20000, scoped, tag = 'input window, operand 1, single buffered']
    #allocation7 [shape = 's32[1]{0}', space=sflag, size = 0x4, scoped, tag = 'scoped memory for tpu_custom_call.1']
    #allocation8 [shape = 'u8[131072]{0}', space=vmem, size = 0x20000, scoped, tag = 'input window, operand 2, single buffered']
    #allocation9 [shape = 'u8[65536]{0}', space=vmem, size = 0x10000, scoped, tag = 'input window, operand 6, single buffered']
    #allocation10 [shape = 's32[1]{0}', space=sflag, size = 0x4, scoped, tag = 'scoped memory for tpu_custom_call.1']
    #allocation11 [shape = 'u8[4096]{0}', space=vmem, size = 0x1000, scoped, tag = 'output window, operand 0, single buffered']
    %13 = vsyncpa [#allocation4], 0
    %14 = vsyncpa [#allocation7], 0
    %15 = vsyncpa [#allocation10], 0
    %16 = vsyncpa [#allocation5], 0
    // Predicated region
    $region2: #{tpu_custom_call.1} parent=1 // pred_check
      _
    $region3: #{tpu_custom_call.1} parent=1 // pred_check_branch
      %18 = sbr.rel (0) target = $region5
    $region4: #{tpu_custom_call.1} parent=1 // pred_region
      %s20 = ssub.s32 1024, 1024
      %21 = vsyncadd [#allocation4], %s20
      %s22 = sshll.u32 [#allocation3], 4
      %s23 = int_to_ptr.vmem [resolvable:$true] %s22
      %28 = dma.hbm_to_vmem [thread:$0]  %s0, 1024, %s23, [#allocation4], 128, 128, 8
    $region5: #{tpu_custom_call.1} parent=1 // pred_fallthru
      _
    // Predicated region
    $region6: #{tpu_custom_call.1} parent=1 // pred_check
      _
    $region7: #{tpu_custom_call.1} parent=1 // pred_check_branch
      %30 = sbr.rel (0) target = $region9
    $region8: #{tpu_custom_call.1} parent=1 // pred_region
      %s32 = ssub.s32 4096, 4096
      %33 = vsyncadd [#allocation7], %s32
      %s34 = sshll.u32 [#allocation6], 4
      %s35 = int_to_ptr.vmem [resolvable:$true] %s34
      %40 = dma.hbm_to_vmem [thread:$0]  %s1, 4096, %s35, [#allocation7], 128, 128, 8
    $region9: #{tpu_custom_call.1} parent=1 // pred_fallthru
      _
    // Predicated region
    $region10: #{tpu_custom_call.1} parent=1 // pred_check
      _
    $region11: #{tpu_custom_call.1} parent=1 // pred_check_branch
      %42 = sbr.rel (0) target = $region13
    $region12: #{tpu_custom_call.1} parent=1 // pred_region
      %s44 = ssub.s32 4096, 4096
      %45 = vsyncadd [#allocation7], %s44
      %s46 = sshll.u32 [#allocation8], 4
      %s47 = int_to_ptr.vmem [resolvable:$true] %s46
      %52 = dma.hbm_to_vmem [thread:$0]  %s2, 4096, %s47, [#allocation7], 128, 128, 8
    $region13: #{tpu_custom_call.1} parent=1 // pred_fallthru
      _
    // Predicated region
    $region14: #{tpu_custom_call.1} parent=1 // pred_check
      _
    $region15: #{tpu_custom_call.1} parent=1 // pred_check_branch
      %54 = sbr.rel (0) target = $region17
    $region16: #{tpu_custom_call.1} parent=1 // pred_region
      _
    $region17: #{tpu_custom_call.1} parent=1 // pred_fallthru
      _
    // Predicated region
    $region18: #{tpu_custom_call.1} parent=1 // pred_check
      _
    $region19: #{tpu_custom_call.1} parent=1 // pred_check_branch
      %56 = sbr.rel (0) target = $region21
    $region20: #{tpu_custom_call.1} parent=1 // pred_region
      _
    $region21: #{tpu_custom_call.1} parent=1 // pred_fallthru
      _
    // Predicated region
    $region22: #{tpu_custom_call.1} parent=1 // pred_check
      _
    $region23: #{tpu_custom_call.1} parent=1 // pred_check_branch
      %58 = sbr.rel (0) target = $region25
    $region24: #{tpu_custom_call.1} parent=1 // pred_region
      _
    $region25: #{tpu_custom_call.1} parent=1 // pred_fallthru
      _
    // Predicated region
    $region26: #{tpu_custom_call.1} parent=1 // pred_check
      _
    $region27: #{tpu_custom_call.1} parent=1 // pred_check_branch
      %60 = sbr.rel (0) target = $region29
    $region28: #{tpu_custom_call.1} parent=1 // pred_region
      %s62 = ssub.s32 2048, 2048
      %63 = vsyncadd [#allocation10], %s62
      %s64 = sshll.u32 [#allocation9], 4
      %s65 = int_to_ptr.vmem [resolvable:$true] %s64
      %70 = dma.hbm_to_vmem [thread:$0]  %s6, 2048, %s65, [#allocation10], 128, 128, 8
    $region29: #{tpu_custom_call.1} parent=1 // pred_fallthru
      _
    // Predicated region
    $region30: #{tpu_custom_call.1} parent=1 // pred_check
      _
    $region31: #{tpu_custom_call.1} parent=1 // pred_check_branch
      %72 = sbr.rel (0) target = $region33
    $region32: #{tpu_custom_call.1} parent=1 // pred_region
      _
    $region33: #{tpu_custom_call.1} parent=1 // pred_fallthru
      _
    // Predicated region
    $region34: #{tpu_custom_call.1} parent=1 // pred_check
      _
    $region35: #{tpu_custom_call.1} parent=1 // pred_check_branch
      %74 = sbr.rel (0) target = $region37
    $region36: #{tpu_custom_call.1} parent=1 // pred_region
      %75 = dma.done [#allocation4], 1024
    $region37: #{tpu_custom_call.1} parent=1 // pred_fallthru
      _
    // Predicated region
    $region38: #{tpu_custom_call.1} parent=1 // pred_check
      _
    $region39: #{tpu_custom_call.1} parent=1 // pred_check_branch
      %77 = sbr.rel (0) target = $region41
    $region40: #{tpu_custom_call.1} parent=1 // pred_region
      %78 = dma.done [#allocation7], 4096
    $region41: #{tpu_custom_call.1} parent=1 // pred_fallthru
      _
    // Predicated region
    $region42: #{tpu_custom_call.1} parent=1 // pred_check
      _
    $region43: #{tpu_custom_call.1} parent=1 // pred_check_branch
      %80 = sbr.rel (0) target = $region45
    $region44: #{tpu_custom_call.1} parent=1 // pred_region
      %81 = dma.done [#allocation7], 4096
    $region45: #{tpu_custom_call.1} parent=1 // pred_fallthru
      _
    // Predicated region
    $region46: #{tpu_custom_call.1} parent=1 // pred_check
      _
    $region47: #{tpu_custom_call.1} parent=1 // pred_check_branch
      %83 = sbr.rel (0) target = $region49
    $region48: #{tpu_custom_call.1} parent=1 // pred_region
      %84 = dma.done [#allocation10], 2048
    $region49: #{tpu_custom_call.1} parent=1 // pred_fallthru
      _
    %v85 = vld [vmem:[#allocation8] sm:$0xff]
    %v86 = vld [vmem:[#allocation8 + $0x8] sm:$0xff]
    %v87 = vld [vmem:[#allocation8 + $0x10] sm:$0xff]
    %v88 = vld [vmem:[#allocation8 + $0x18] sm:$0xff]
    %v89 = vld [vmem:[#allocation8 + $0x20] sm:$0xff]
    %v90 = vld [vmem:[#allocation8 + $0x28] sm:$0xff]
    %v91 = vld [vmem:[#allocation8 + $0x30] sm:$0xff]
    %v92 = vld [vmem:[#allocation8 + $0x38] sm:$0xff]
    %v93 = vld [vmem:[#allocation8 + $0x40] sm:$0xff]
    %v94 = vld [vmem:[#allocation8 + $0x48] sm:$0xff]
    %v95 = vld [vmem:[#allocation8 + $0x50] sm:$0xff]
    %v96 = vld [vmem:[#allocation8 + $0x58] sm:$0xff]
    %v97 = vld [vmem:[#allocation8 + $0x60] sm:$0xff]
    %v98 = vld [vmem:[#allocation8 + $0x68] sm:$0xff]
    %v99 = vld [vmem:[#allocation8 + $0x70] sm:$0xff]
    %v100 = vld [vmem:[#allocation8 + $0x78] sm:$0xff]
    %v101 = vld [vmem:[#allocation3] sm:$0xff]
    %v102 = vld [vmem:[#allocation3 + $0x8] sm:$0xff]
    %v103 = vld [vmem:[#allocation3 + $0x10] sm:$0xff]
    %v104 = vld [vmem:[#allocation3 + $0x18] sm:$0xff]
    %v105 = vld [vmem:[#allocation3 + $0x20] sm:$0xff]
    %v106 = vld [vmem:[#allocation3 + $0x28] sm:$0xff]
    %v107 = vld [vmem:[#allocation3 + $0x30] sm:$0xff]
    %v108 = vld [vmem:[#allocation3 + $0x38] sm:$0xff]
    %v109 = vld [vmem:[#allocation6] sm:$0xff]
    %v110 = vld [vmem:[#allocation6 + $0x8] sm:$0xff]
    %v111 = vld [vmem:[#allocation6 + $0x10] sm:$0xff]
    %v112 = vld [vmem:[#allocation6 + $0x18] sm:$0xff]
    %v113 = vld [vmem:[#allocation6 + $0x20] sm:$0xff]
    %v114 = vld [vmem:[#allocation6 + $0x28] sm:$0xff]
    %v115 = vld [vmem:[#allocation6 + $0x30] sm:$0xff]
    %v116 = vld [vmem:[#allocation6 + $0x38] sm:$0xff]
    %v117 = vld [vmem:[#allocation6 + $0x40] sm:$0xff]
    %v118 = vld [vmem:[#allocation6 + $0x48] sm:$0xff]
    %v119 = vld [vmem:[#allocation6 + $0x50] sm:$0xff]
    %v120 = vld [vmem:[#allocation6 + $0x58] sm:$0xff]
    %v121 = vld [vmem:[#allocation6 + $0x60] sm:$0xff]
    %v122 = vld [vmem:[#allocation6 + $0x68] sm:$0xff]
    %v123 = vld [vmem:[#allocation6 + $0x70] sm:$0xff]
    %v124 = vld [vmem:[#allocation6 + $0x78] sm:$0xff]
    %v125 = vld [vmem:[%s3] sm:$0x1]
    %v127 = vlaneseq
    %v128 = vshrl.u32 %v127, 7
    %v129 = vsub.s32 0, %v128
    %v130 = vrot.slane %v125, %v129
    %132 = vmatprep.subr.mxu0 0.0
    %133 = vmatpush1.msra.mxu0 %v109
    %134 = vmatprep.subr.mxu0 0.0
    %135 = vmatpush1.msra.mxu0 %v110
    %136 = vmatprep.subr.mxu0 0.0
    %137 = vmatpush1.msra.mxu0 %v111
    %138 = vmatprep.subr.mxu0 0.0
    %139 = vmatpush1.msra.mxu0 %v112
    %140 = vmatprep.subr.mxu0 0.0
    %141 = vmatpush1.msra.mxu0 %v113
    %142 = vmatprep.subr.mxu0 0.0
    %143 = vmatpush1.msra.mxu0 %v114
    %144 = vmatprep.subr.mxu0 0.0
    %145 = vmatpush1.msra.mxu0 %v115
    %146 = vmatprep.subr.mxu0 0.0
    %147 = vmatpush1.msra.mxu0 %v116
    %148 = vmatprep.subr.mxu0 0.0
    %149 = vmatpush1.msra.mxu0 %v117
    %150 = vmatprep.subr.mxu0 0.0
    %151 = vmatpush1.msra.mxu0 %v118
    %152 = vmatprep.subr.mxu0 0.0
    %153 = vmatpush1.msra.mxu0 %v119
    %154 = vmatprep.subr.mxu0 0.0
    %155 = vmatpush1.msra.mxu0 %v120
    %156 = vmatprep.subr.mxu0 0.0
    %157 = vmatpush1.msra.mxu0 %v121
    %158 = vmatprep.subr.mxu0 0.0
    %159 = vmatpush1.msra.mxu0 %v122
    %160 = vmatprep.subr.mxu0 0.0
    %161 = vmatpush1.msra.mxu0 %v123
    %162 = vmatprep.subr.mxu0 0.0
    %163 = vmatpush1.msra.mxu0 %v124
    %164 = vmatprep.subr.mxu0 0.0
    %165 = vmatpush1.msra.mxu0 0.0
    %166 = vmatprep.subr.mxu0 0.0
    %167 = vmatpush1.msra.mxu0 0.0
    %168 = vmatprep.subr.mxu0 0.0
    %169 = vmatpush1.msra.mxu0 0.0
    %170 = vmatprep.subr.mxu0 0.0
    %171 = vmatpush1.msra.mxu0 0.0
    %172 = vmatprep.subr.mxu0 0.0
    %173 = vmatpush1.msra.mxu0 0.0
    %174 = vmatprep.subr.mxu0 0.0
    %175 = vmatpush1.msra.mxu0 0.0
    %176 = vmatprep.subr.mxu0 0.0
    %177 = vmatpush1.msra.mxu0 0.0
    %178 = vmatprep.subr.mxu0 0.0
    %179 = vmatpush1.msra.mxu0 0.0
    %180 = vmatprep.subr.mxu0 0.0
    %181 = vmatpush1.msra.mxu0 0.0
    %182 = vmatprep.subr.mxu0 0.0
    %183 = vmatpush1.msra.mxu0 0.0
    %184 = vmatprep.subr.mxu0 0.0
    %185 = vmatpush1.msra.mxu0 0.0
    %186 = vmatprep.subr.mxu0 0.0
    %187 = vmatpush1.msra.mxu0 0.0
    %188 = vmatprep.subr.mxu0 0.0
    %189 = vmatpush1.msra.mxu0 0.0
    %190 = vmatprep.subr.mxu0 0.0
    %191 = vmatpush1.msra.mxu0 0.0
    %192 = vmatprep.subr.mxu0 0.0
    %193 = vmatpush1.msra.mxu0 0.0
    %194 = vmatprep.subr.mxu0 0.0
    %195 = vmatpush1.msra.mxu0 0.0
    %196 = vmatprep.mubr.f32.mxu0 0.0
    %197 = vmatmul.mubr.f32.gmra.mrb[0].mxu0 %v101
    %v198 = vpop.f32.mrb[0].mxu0
    %v199 = vadd.f32 %v130, %v198
    %v200 = vpop.f32.mrb[0].mxu0
    %201 = vmatprep.mubr.f32.mxu0 0.0
    %202 = vmatmul.mubr.f32.gmra.mrb[0].mxu0 %v102
    %v203 = vpop.f32.mrb[0].mxu0
    %v204 = vadd.f32 %v130, %v203
    %v205 = vpop.f32.mrb[0].mxu0
    %206 = vmatprep.mubr.f32.mxu0 0.0
    %207 = vmatmul.mubr.f32.gmra.mrb[0].mxu0 %v103
    %v208 = vpop.f32.mrb[0].mxu0
    %v209 = vadd.f32 %v130, %v208
    %v210 = vpop.f32.mrb[0].mxu0
    %211 = vmatprep.mubr.f32.mxu0 0.0
    %212 = vmatmul.mubr.f32.gmra.mrb[0].mxu0 %v104
    %v213 = vpop.f32.mrb[0].mxu0
    %v214 = vadd.f32 %v130, %v213
    %v215 = vpop.f32.mrb[0].mxu0
    %216 = vmatprep.mubr.f32.mxu0 0.0
    %217 = vmatmul.mubr.f32.gmra.mrb[0].mxu0 %v105
    %v218 = vpop.f32.mrb[0].mxu0
    %v219 = vadd.f32 %v130, %v218
    %v220 = vpop.f32.mrb[0].mxu0
    %221 = vmatprep.mubr.f32.mxu0 0.0
    %222 = vmatmul.mubr.f32.gmra.mrb[0].mxu0 %v106
    %v223 = vpop.f32.mrb[0].mxu0
    %v224 = vadd.f32 %v130, %v223
    %v225 = vpop.f32.mrb[0].mxu0
    %226 = vmatprep.mubr.f32.mxu0 0.0
    %227 = vmatmul.mubr.f32.gmra.mrb[0].mxu0 %v107
    %v228 = vpop.f32.mrb[0].mxu0
    %v229 = vadd.f32 %v130, %v228
    %v230 = vpop.f32.mrb[0].mxu0
    %231 = vmatprep.mubr.f32.mxu0 0.0
    %232 = vmatmul.mubr.f32.gmra.mrb[0].mxu0 %v108
    %v233 = vpop.f32.mrb[0].mxu0
    %v234 = vadd.f32 %v130, %v233
    %v235 = vpop.f32.mrb[0].mxu0
    %236 = vdwg.mxu0
    %237 = vst [vmem:[#allocation2] sm:$0xff] %v199
    %238 = vst [vmem:[#allocation2 + $0x8] sm:$0xff] %v204
    %239 = vst [vmem:[#allocation2 + $0x10] sm:$0xff] %v209
    %240 = vst [vmem:[#allocation2 + $0x18] sm:$0xff] %v214
    %241 = vst [vmem:[#allocation2 + $0x20] sm:$0xff] %v219
    %242 = vst [vmem:[#allocation2 + $0x28] sm:$0xff] %v224
    %243 = vst [vmem:[#allocation2 + $0x30] sm:$0xff] %v229
    %244 = vst [vmem:[#allocation2 + $0x38] sm:$0xff] %v234
    %v245 = vld [vmem:[#allocation2] sm:$0xff]
    %246 = vmatprep.subr.mxu0 0.0
    %247 = vmatpush1.msra.mxu0 %v85
    %248 = vmatprep.subr.mxu0 0.0
    %249 = vmatpush1.msra.mxu0 %v86
    %250 = vmatprep.subr.mxu0 0.0
    %251 = vmatpush1.msra.mxu0 %v87
    %252 = vmatprep.subr.mxu0 0.0
    %253 = vmatpush1.msra.mxu0 %v88
    %254 = vmatprep.subr.mxu0 0.0
    %255 = vmatpush1.msra.mxu0 %v89
    %256 = vmatprep.subr.mxu0 0.0
    %257 = vmatpush1.msra.mxu0 %v90
    %258 = vmatprep.subr.mxu0 0.0
    %259 = vmatpush1.msra.mxu0 %v91
    %260 = vmatprep.subr.mxu0 0.0
    %261 = vmatpush1.msra.mxu0 %v92
    %262 = vmatprep.subr.mxu0 0.0
    %263 = vmatpush1.msra.mxu0 %v93
    %264 = vmatprep.subr.mxu0 0.0
    %265 = vmatpush1.msra.mxu0 %v94
    %266 = vmatprep.subr.mxu0 0.0
    %267 = vmatpush1.msra.mxu0 %v95
    %268 = vmatprep.subr.mxu0 0.0
    %269 = vmatpush1.msra.mxu0 %v96
    %270 = vmatprep.subr.mxu0 0.0
    %271 = vmatpush1.msra.mxu0 %v97
    %272 = vmatprep.subr.mxu0 0.0
    %273 = vmatpush1.msra.mxu0 %v98
    %274 = vmatprep.subr.mxu0 0.0
    %275 = vmatpush1.msra.mxu0 %v99
    %276 = vmatprep.subr.mxu0 0.0
    %277 = vmatpush1.msra.mxu0 %v100
    %278 = vmatprep.subr.mxu0 0.0
    %279 = vmatpush1.msra.mxu0 0.0
    %280 = vmatprep.subr.mxu0 0.0
    %281 = vmatpush1.msra.mxu0 0.0
    %282 = vmatprep.subr.mxu0 0.0
    %283 = vmatpush1.msra.mxu0 0.0
    %284 = vmatprep.subr.mxu0 0.0
    %285 = vmatpush1.msra.mxu0 0.0
    %286 = vmatprep.subr.mxu0 0.0
    %287 = vmatpush1.msra.mxu0 0.0
    %288 = vmatprep.subr.mxu0 0.0
    %289 = vmatpush1.msra.mxu0 0.0
    %290 = vmatprep.subr.mxu0 0.0
    %291 = vmatpush1.msra.mxu0 0.0
    %292 = vmatprep.subr.mxu0 0.0
    %293 = vmatpush1.msra.mxu0 0.0
    %294 = vmatprep.subr.mxu0 0.0
    %295 = vmatpush1.msra.mxu0 0.0
    %296 = vmatprep.subr.mxu0 0.0
    %297 = vmatpush1.msra.mxu0 0.0
    %298 = vmatprep.subr.mxu0 0.0
    %299 = vmatpush1.msra.mxu0 0.0
    %300 = vmatprep.subr.mxu0 0.0
    %301 = vmatpush1.msra.mxu0 0.0
    %302 = vmatprep.subr.mxu0 0.0
    %303 = vmatpush1.msra.mxu0 0.0
    %304 = vmatprep.subr.mxu0 0.0
    %305 = vmatpush1.msra.mxu0 0.0
    %306 = vmatprep.subr.mxu0 0.0
    %307 = vmatpush1.msra.mxu0 0.0
    %308 = vmatprep.subr.mxu0 0.0
    %309 = vmatpush1.msra.mxu0 0.0
    %310 = vmatprep.mubr.f32.mxu0 0.0
    %311 = vmatmul.mubr.f32.gmra.mrb[0].mxu0 0.0
    %v312 = vpop.f32.mrb[0].mxu0
    %v313 = vadd.f32 0.0, %v312
    %v314 = vpop.f32.mrb[0].mxu0
    %315 = vdwg.mxu0
    %v316 = vadd.f32 %v245, %v313
    %v317 = vtanh.pop %v316
    %318 = vst [vmem:[#allocation2] sm:$0xff] %v317
    %s319 = scalar_lea.vmem [#allocation2], 8
    %v320 = vld [vmem:[%s319] sm:$0xff]
    %321 = vmatprep.subr.mxu0 0.0
    %322 = vmatpush1.msra.mxu0 %v85
    %323 = vmatprep.subr.mxu0 0.0
    %324 = vmatpush1.msra.mxu0 %v86
    %325 = vmatprep.subr.mxu0 0.0
    %326 = vmatpush1.msra.mxu0 %v87
    %327 = vmatprep.subr.mxu0 0.0
    %328 = vmatpush1.msra.mxu0 %v88
    %329 = vmatprep.subr.mxu0 0.0
    %330 = vmatpush1.msra.mxu0 %v89
    %331 = vmatprep.subr.mxu0 0.0
    %332 = vmatpush1.msra.mxu0 %v90
    %333 = vmatprep.subr.mxu0 0.0
    %334 = vmatpush1.msra.mxu0 %v91
    %335 = vmatprep.subr.mxu0 0.0
    %336 = vmatpush1.msra.mxu0 %v92
    %337 = vmatprep.subr.mxu0 0.0
    %338 = vmatpush1.msra.mxu0 %v93
    %339 = vmatprep.subr.mxu0 0.0
    %340 = vmatpush1.msra.mxu0 %v94
    %341 = vmatprep.subr.mxu0 0.0
    %342 = vmatpush1.msra.mxu0 %v95
    %343 = vmatprep.subr.mxu0 0.0
    %344 = vmatpush1.msra.mxu0 %v96
    %345 = vmatprep.subr.mxu0 0.0
    %346 = vmatpush1.msra.mxu0 %v97
    %347 = vmatprep.subr.mxu0 0.0
    %348 = vmatpush1.msra.mxu0 %v98
    %349 = vmatprep.subr.mxu0 0.0
    %350 = vmatpush1.msra.mxu0 %v99
    %351 = vmatprep.subr.mxu0 0.0
    %352 = vmatpush1.msra.mxu0 %v100
    %353 = vmatprep.subr.mxu0 0.0
    %354 = vmatpush1.msra.mxu0 0.0
    %355 = vmatprep.subr.mxu0 0.0
    %356 = vmatpush1.msra.mxu0 0.0
    %357 = vmatprep.subr.mxu0 0.0
    %358 = vmatpush1.msra.mxu0 0.0
    %359 = vmatprep.subr.mxu0 0.0
    %360 = vmatpush1.msra.mxu0 0.0
    %361 = vmatprep.subr.mxu0 0.0
    %362 = vmatpush1.msra.mxu0 0.0
    %363 = vmatprep.subr.mxu0 0.0
    %364 = vmatpush1.msra.mxu0 0.0
    %365 = vmatprep.subr.mxu0 0.0
    %366 = vmatpush1.msra.mxu0 0.0
    %367 = vmatprep.subr.mxu0 0.0
    %368 = vmatpush1.msra.mxu0 0.0
    %369 = vmatprep.subr.mxu0 0.0
    %370 = vmatpush1.msra.mxu0 0.0
    %371 = vmatprep.subr.mxu0 0.0
    %372 = vmatpush1.msra.mxu0 0.0
    %373 = vmatprep.subr.mxu0 0.0
    %374 = vmatpush1.msra.mxu0 0.0
    %375 = vmatprep.subr.mxu0 0.0
    %376 = vmatpush1.msra.mxu0 0.0
    %377 = vmatprep.subr.mxu0 0.0
    %378 = vmatpush1.msra.mxu0 0.0
    %379 = vmatprep.subr.mxu0 0.0
    %380 = vmatpush1.msra.mxu0 0.0
    %381 = vmatprep.subr.mxu0 0.0
    %382 = vmatpush1.msra.mxu0 0.0
    %383 = vmatprep.subr.mxu0 0.0
    %384 = vmatpush1.msra.mxu0 0.0
    %385 = vmatprep.mubr.f32.mxu0 0.0
    %386 = vmatmul.mubr.f32.gmra.mrb[0].mxu0 %v317
    %v387 = vpop.f32.mrb[0].mxu0
    %v388 = vadd.f32 0.0, %v387
    %v389 = vpop.f32.mrb[0].mxu0
    %390 = vdwg.mxu0
    %v391 = vadd.f32 %v320, %v388
    %v392 = vtanh.pop %v391
    %393 = vst [vmem:[%s319] sm:$0xff] %v392
    %s394 = scalar_lea.vmem [#allocation2], 16
    %v395 = vld [vmem:[%s394] sm:$0xff]
    %396 = vmatprep.subr.mxu0 0.0
    %397 = vmatpush1.msra.mxu0 %v85
    %398 = vmatprep.subr.mxu0 0.0
    %399 = vmatpush1.msra.mxu0 %v86
    %400 = vmatprep.subr.mxu0 0.0
    %401 = vmatpush1.msra.mxu0 %v87
    %402 = vmatprep.subr.mxu0 0.0
    %403 = vmatpush1.msra.mxu0 %v88
    %404 = vmatprep.subr.mxu0 0.0
    %405 = vmatpush1.msra.mxu0 %v89
    %406 = vmatprep.subr.mxu0 0.0
    %407 = vmatpush1.msra.mxu0 %v90
    %408 = vmatprep.subr.mxu0 0.0
    %409 = vmatpush1.msra.mxu0 %v91
    %410 = vmatprep.subr.mxu0 0.0
    %411 = vmatpush1.msra.mxu0 %v92
    %412 = vmatprep.subr.mxu0 0.0
    %413 = vmatpush1.msra.mxu0 %v93
    %414 = vmatprep.subr.mxu0 0.0
    %415 = vmatpush1.msra.mxu0 %v94
    %416 = vmatprep.subr.mxu0 0.0
    %417 = vmatpush1.msra.mxu0 %v95
    %418 = vmatprep.subr.mxu0 0.0
    %419 = vmatpush1.msra.mxu0 %v96
    %420 = vmatprep.subr.mxu0 0.0
    %421 = vmatpush1.msra.mxu0 %v97
    %422 = vmatprep.subr.mxu0 0.0
    %423 = vmatpush1.msra.mxu0 %v98
    %424 = vmatprep.subr.mxu0 0.0
    %425 = vmatpush1.msra.mxu0 %v99
    %426 = vmatprep.subr.mxu0 0.0
    %427 = vmatpush1.msra.mxu0 %v100
    %428 = vmatprep.subr.mxu0 0.0
    %429 = vmatpush1.msra.mxu0 0.0
    %430 = vmatprep.subr.mxu0 0.0
    %431 = vmatpush1.msra.mxu0 0.0
    %432 = vmatprep.subr.mxu0 0.0
    %433 = vmatpush1.msra.mxu0 0.0
    %434 = vmatprep.subr.mxu0 0.0
    %435 = vmatpush1.msra.mxu0 0.0
    %436 = vmatprep.subr.mxu0 0.0
    %437 = vmatpush1.msra.mxu0 0.0
    %438 = vmatprep.subr.mxu0 0.0
    %439 = vmatpush1.msra.mxu0 0.0
    %440 = vmatprep.subr.mxu0 0.0
    %441 = vmatpush1.msra.mxu0 0.0
    %442 = vmatprep.subr.mxu0 0.0
    %443 = vmatpush1.msra.mxu0 0.0
    %444 = vmatprep.subr.mxu0 0.0
    %445 = vmatpush1.msra.mxu0 0.0
    %446 = vmatprep.subr.mxu0 0.0
    %447 = vmatpush1.msra.mxu0 0.0
    %448 = vmatprep.subr.mxu0 0.0
    %449 = vmatpush1.msra.mxu0 0.0
    %450 = vmatprep.subr.mxu0 0.0
    %451 = vmatpush1.msra.mxu0 0.0
    %452 = vmatprep.subr.mxu0 0.0
    %453 = vmatpush1.msra.mxu0 0.0
    %454 = vmatprep.subr.mxu0 0.0
    %455 = vmatpush1.msra.mxu0 0.0
    %456 = vmatprep.subr.mxu0 0.0
    %457 = vmatpush1.msra.mxu0 0.0
    %458 = vmatprep.subr.mxu0 0.0
    %459 = vmatpush1.msra.mxu0 0.0
    %460 = vmatprep.mubr.f32.mxu0 0.0
    %461 = vmatmul.mubr.f32.gmra.mrb[0].mxu0 %v392
    %v462 = vpop.f32.mrb[0].mxu0
    %v463 = vadd.f32 0.0, %v462
    %v464 = vpop.f32.mrb[0].mxu0
    %465 = vdwg.mxu0
    %v466 = vadd.f32 %v395, %v463
    %v467 = vtanh.pop %v466
    %468 = vst [vmem:[%s394] sm:$0xff] %v467
    %s469 = scalar_lea.vmem [#allocation2], 24
    %v470 = vld [vmem:[%s469] sm:$0xff]
    %471 = vmatprep.subr.mxu0 0.0
    %472 = vmatpush1.msra.mxu0 %v85
    %473 = vmatprep.subr.mxu0 0.0
    %474 = vmatpush1.msra.mxu0 %v86
    %475 = vmatprep.subr.mxu0 0.0
    %476 = vmatpush1.msra.mxu0 %v87
    %477 = vmatprep.subr.mxu0 0.0
    %478 = vmatpush1.msra.mxu0 %v88
    %479 = vmatprep.subr.mxu0 0.0
    %480 = vmatpush1.msra.mxu0 %v89
    %481 = vmatprep.subr.mxu0 0.0
    %482 = vmatpush1.msra.mxu0 %v90
    %483 = vmatprep.subr.mxu0 0.0
    %484 = vmatpush1.msra.mxu0 %v91
    %485 = vmatprep.subr.mxu0 0.0
    %486 = vmatpush1.msra.mxu0 %v92
    %487 = vmatprep.subr.mxu0 0.0
    %488 = vmatpush1.msra.mxu0 %v93
    %489 = vmatprep.subr.mxu0 0.0
    %490 = vmatpush1.msra.mxu0 %v94
    %491 = vmatprep.subr.mxu0 0.0
    %492 = vmatpush1.msra.mxu0 %v95
    %493 = vmatprep.subr.mxu0 0.0
    %494 = vmatpush1.msra.mxu0 %v96
    %495 = vmatprep.subr.mxu0 0.0
    %496 = vmatpush1.msra.mxu0 %v97
    %497 = vmatprep.subr.mxu0 0.0
    %498 = vmatpush1.msra.mxu0 %v98
    %499 = vmatprep.subr.mxu0 0.0
    %500 = vmatpush1.msra.mxu0 %v99
    %501 = vmatprep.subr.mxu0 0.0
    %502 = vmatpush1.msra.mxu0 %v100
    %503 = vmatprep.subr.mxu0 0.0
    %504 = vmatpush1.msra.mxu0 0.0
    %505 = vmatprep.subr.mxu0 0.0
    %506 = vmatpush1.msra.mxu0 0.0
    %507 = vmatprep.subr.mxu0 0.0
    %508 = vmatpush1.msra.mxu0 0.0
    %509 = vmatprep.subr.mxu0 0.0
    %510 = vmatpush1.msra.mxu0 0.0
    %511 = vmatprep.subr.mxu0 0.0
    %512 = vmatpush1.msra.mxu0 0.0
    %513 = vmatprep.subr.mxu0 0.0
    %514 = vmatpush1.msra.mxu0 0.0
    %515 = vmatprep.subr.mxu0 0.0
    %516 = vmatpush1.msra.mxu0 0.0
    %517 = vmatprep.subr.mxu0 0.0
    %518 = vmatpush1.msra.mxu0 0.0
    %519 = vmatprep.subr.mxu0 0.0
    %520 = vmatpush1.msra.mxu0 0.0
    %521 = vmatprep.subr.mxu0 0.0
    %522 = vmatpush1.msra.mxu0 0.0
    %523 = vmatprep.subr.mxu0 0.0
    %524 = vmatpush1.msra.mxu0 0.0
    %525 = vmatprep.subr.mxu0 0.0
    %526 = vmatpush1.msra.mxu0 0.0
    %527 = vmatprep.subr.mxu0 0.0
    %528 = vmatpush1.msra.mxu0 0.0
    %529 = vmatprep.subr.mxu0 0.0
    %530 = vmatpush1.msra.mxu0 0.0
    %531 = vmatprep.subr.mxu0 0.0
    %532 = vmatpush1.msra.mxu0 0.0
    %533 = vmatprep.subr.mxu0 0.0
    %534 = vmatpush1.msra.mxu0 0.0
    %535 = vmatprep.mubr.f32.mxu0 0.0
    %536 = vmatmul.mubr.f32.gmra.mrb[0].mxu0 %v467
    %v537 = vpop.f32.mrb[0].mxu0
    %v538 = vadd.f32 0.0, %v537
    %v539 = vpop.f32.mrb[0].mxu0
    %540 = vdwg.mxu0
    %v541 = vadd.f32 %v470, %v538
    %v542 = vtanh.pop %v541
    %543 = vst [vmem:[%s469] sm:$0xff] %v542
    %s544 = scalar_lea.vmem [#allocation2], 32
    %v545 = vld [vmem:[%s544] sm:$0xff]
    %546 = vmatprep.subr.mxu0 0.0
    %547 = vmatpush1.msra.mxu0 %v85
    %548 = vmatprep.subr.mxu0 0.0
    %549 = vmatpush1.msra.mxu0 %v86
    %550 = vmatprep.subr.mxu0 0.0
    %551 = vmatpush1.msra.mxu0 %v87
    %552 = vmatprep.subr.mxu0 0.0
    %553 = vmatpush1.msra.mxu0 %v88
    %554 = vmatprep.subr.mxu0 0.0
    %555 = vmatpush1.msra.mxu0 %v89
    %556 = vmatprep.subr.mxu0 0.0
    %557 = vmatpush1.msra.mxu0 %v90
    %558 = vmatprep.subr.mxu0 0.0
    %559 = vmatpush1.msra.mxu0 %v91
    %560 = vmatprep.subr.mxu0 0.0
    %561 = vmatpush1.msra.mxu0 %v92
    %562 = vmatprep.subr.mxu0 0.0
    %563 = vmatpush1.msra.mxu0 %v93
    %564 = vmatprep.subr.mxu0 0.0
    %565 = vmatpush1.msra.mxu0 %v94
    %566 = vmatprep.subr.mxu0 0.0
    %567 = vmatpush1.msra.mxu0 %v95
    %568 = vmatprep.subr.mxu0 0.0
    %569 = vmatpush1.msra.mxu0 %v96
    %570 = vmatprep.subr.mxu0 0.0
    %571 = vmatpush1.msra.mxu0 %v97
    %572 = vmatprep.subr.mxu0 0.0
    %573 = vmatpush1.msra.mxu0 %v98
    %574 = vmatprep.subr.mxu0 0.0
    %575 = vmatpush1.msra.mxu0 %v99
    %576 = vmatprep.subr.mxu0 0.0
    %577 = vmatpush1.msra.mxu0 %v100
    %578 = vmatprep.subr.mxu0 0.0
    %579 = vmatpush1.msra.mxu0 0.0
    %580 = vmatprep.subr.mxu0 0.0
    %581 = vmatpush1.msra.mxu0 0.0
    %582 = vmatprep.subr.mxu0 0.0
    %583 = vmatpush1.msra.mxu0 0.0
    %584 = vmatprep.subr.mxu0 0.0
    %585 = vmatpush1.msra.mxu0 0.0
    %586 = vmatprep.subr.mxu0 0.0
    %587 = vmatpush1.msra.mxu0 0.0
    %588 = vmatprep.subr.mxu0 0.0
    %589 = vmatpush1.msra.mxu0 0.0
    %590 = vmatprep.subr.mxu0 0.0
    %591 = vmatpush1.msra.mxu0 0.0
    %592 = vmatprep.subr.mxu0 0.0
    %593 = vmatpush1.msra.mxu0 0.0
    %594 = vmatprep.subr.mxu0 0.0
    %595 = vmatpush1.msra.mxu0 0.0
    %596 = vmatprep.subr.mxu0 0.0
    %597 = vmatpush1.msra.mxu0 0.0
    %598 = vmatprep.subr.mxu0 0.0
    %599 = vmatpush1.msra.mxu0 0.0
    %600 = vmatprep.subr.mxu0 0.0
    %601 = vmatpush1.msra.mxu0 0.0
    %602 = vmatprep.subr.mxu0 0.0
    %603 = vmatpush1.msra.mxu0 0.0
    %604 = vmatprep.subr.mxu0 0.0
    %605 = vmatpush1.msra.mxu0 0.0
    %606 = vmatprep.subr.mxu0 0.0
    %607 = vmatpush1.msra.mxu0 0.0
    %608 = vmatprep.subr.mxu0 0.0
    %609 = vmatpush1.msra.mxu0 0.0
    %610 = vmatprep.mubr.f32.mxu0 0.0
    %611 = vmatmul.mubr.f32.gmra.mrb[0].mxu0 %v542
    %v612 = vpop.f32.mrb[0].mxu0
    %v613 = vadd.f32 0.0, %v612
    %v614 = vpop.f32.mrb[0].mxu0
    %615 = vdwg.mxu0
    %v616 = vadd.f32 %v545, %v613
    %v617 = vtanh.pop %v616
    %618 = vst [vmem:[%s544] sm:$0xff] %v617
    %s619 = scalar_lea.vmem [#allocation2], 40
    %v620 = vld [vmem:[%s619] sm:$0xff]
    %621 = vmatprep.subr.mxu0 0.0
    %622 = vmatpush1.msra.mxu0 %v85
    %623 = vmatprep.subr.mxu0 0.0
    %624 = vmatpush1.msra.mxu0 %v86
    %625 = vmatprep.subr.mxu0 0.0
    %626 = vmatpush1.msra.mxu0 %v87
    %627 = vmatprep.subr.mxu0 0.0
    %628 = vmatpush1.msra.mxu0 %v88
    %629 = vmatprep.subr.mxu0 0.0
    %630 = vmatpush1.msra.mxu0 %v89
    %631 = vmatprep.subr.mxu0 0.0
    %632 = vmatpush1.msra.mxu0 %v90
    %633 = vmatprep.subr.mxu0 0.0
    %634 = vmatpush1.msra.mxu0 %v91
    %635 = vmatprep.subr.mxu0 0.0
    %636 = vmatpush1.msra.mxu0 %v92
    %637 = vmatprep.subr.mxu0 0.0
    %638 = vmatpush1.msra.mxu0 %v93
    %639 = vmatprep.subr.mxu0 0.0
    %640 = vmatpush1.msra.mxu0 %v94
    %641 = vmatprep.subr.mxu0 0.0
    %642 = vmatpush1.msra.mxu0 %v95
    %643 = vmatprep.subr.mxu0 0.0
    %644 = vmatpush1.msra.mxu0 %v96
    %645 = vmatprep.subr.mxu0 0.0
    %646 = vmatpush1.msra.mxu0 %v97
    %647 = vmatprep.subr.mxu0 0.0
    %648 = vmatpush1.msra.mxu0 %v98
    %649 = vmatprep.subr.mxu0 0.0
    %650 = vmatpush1.msra.mxu0 %v99
    %651 = vmatprep.subr.mxu0 0.0
    %652 = vmatpush1.msra.mxu0 %v100
    %653 = vmatprep.subr.mxu0 0.0
    %654 = vmatpush1.msra.mxu0 0.0
    %655 = vmatprep.subr.mxu0 0.0
    %656 = vmatpush1.msra.mxu0 0.0
    %657 = vmatprep.subr.mxu0 0.0
    %658 = vmatpush1.msra.mxu0 0.0
    %659 = vmatprep.subr.mxu0 0.0
    %660 = vmatpush1.msra.mxu0 0.0
    %661 = vmatprep.subr.mxu0 0.0
    %662 = vmatpush1.msra.mxu0 0.0
    %663 = vmatprep.subr.mxu0 0.0
    %664 = vmatpush1.msra.mxu0 0.0
    %665 = vmatprep.subr.mxu0 0.0
    %666 = vmatpush1.msra.mxu0 0.0
    %667 = vmatprep.subr.mxu0 0.0
    %668 = vmatpush1.msra.mxu0 0.0
    %669 = vmatprep.subr.mxu0 0.0
    %670 = vmatpush1.msra.mxu0 0.0
    %671 = vmatprep.subr.mxu0 0.0
    %672 = vmatpush1.msra.mxu0 0.0
    %673 = vmatprep.subr.mxu0 0.0
    %674 = vmatpush1.msra.mxu0 0.0
    %675 = vmatprep.subr.mxu0 0.0
    %676 = vmatpush1.msra.mxu0 0.0
    %677 = vmatprep.subr.mxu0 0.0
    %678 = vmatpush1.msra.mxu0 0.0
    %679 = vmatprep.subr.mxu0 0.0
    %680 = vmatpush1.msra.mxu0 0.0
    %681 = vmatprep.subr.mxu0 0.0
    %682 = vmatpush1.msra.mxu0 0.0
    %683 = vmatprep.subr.mxu0 0.0
    %684 = vmatpush1.msra.mxu0 0.0
    %685 = vmatprep.mubr.f32.mxu0 0.0
    %686 = vmatmul.mubr.f32.gmra.mrb[0].mxu0 %v617
    %v687 = vpop.f32.mrb[0].mxu0
    %v688 = vadd.f32 0.0, %v687
    %v689 = vpop.f32.mrb[0].mxu0
    %690 = vdwg.mxu0
    %v691 = vadd.f32 %v620, %v688
    %v692 = vtanh.pop %v691
    %693 = vst [vmem:[%s619] sm:$0xff] %v692
    %s694 = scalar_lea.vmem [#allocation2], 48
    %v695 = vld [vmem:[%s694] sm:$0xff]
    %696 = vmatprep.subr.mxu0 0.0
    %697 = vmatpush1.msra.mxu0 %v85
    %698 = vmatprep.subr.mxu0 0.0
    %699 = vmatpush1.msra.mxu0 %v86
    %700 = vmatprep.subr.mxu0 0.0
    %701 = vmatpush1.msra.mxu0 %v87
    %702 = vmatprep.subr.mxu0 0.0
    %703 = vmatpush1.msra.mxu0 %v88
    %704 = vmatprep.subr.mxu0 0.0
    %705 = vmatpush1.msra.mxu0 %v89
    %706 = vmatprep.subr.mxu0 0.0
    %707 = vmatpush1.msra.mxu0 %v90
    %708 = vmatprep.subr.mxu0 0.0
    %709 = vmatpush1.msra.mxu0 %v91
    %710 = vmatprep.subr.mxu0 0.0
    %711 = vmatpush1.msra.mxu0 %v92
    %712 = vmatprep.subr.mxu0 0.0
    %713 = vmatpush1.msra.mxu0 %v93
    %714 = vmatprep.subr.mxu0 0.0
    %715 = vmatpush1.msra.mxu0 %v94
    %716 = vmatprep.subr.mxu0 0.0
    %717 = vmatpush1.msra.mxu0 %v95
    %718 = vmatprep.subr.mxu0 0.0
    %719 = vmatpush1.msra.mxu0 %v96
    %720 = vmatprep.subr.mxu0 0.0
    %721 = vmatpush1.msra.mxu0 %v97
    %722 = vmatprep.subr.mxu0 0.0
    %723 = vmatpush1.msra.mxu0 %v98
    %724 = vmatprep.subr.mxu0 0.0
    %725 = vmatpush1.msra.mxu0 %v99
    %726 = vmatprep.subr.mxu0 0.0
    %727 = vmatpush1.msra.mxu0 %v100
    %728 = vmatprep.subr.mxu0 0.0
    %729 = vmatpush1.msra.mxu0 0.0
    %730 = vmatprep.subr.mxu0 0.0
    %731 = vmatpush1.msra.mxu0 0.0
    %732 = vmatprep.subr.mxu0 0.0
    %733 = vmatpush1.msra.mxu0 0.0
    %734 = vmatprep.subr.mxu0 0.0
    %735 = vmatpush1.msra.mxu0 0.0
    %736 = vmatprep.subr.mxu0 0.0
    %737 = vmatpush1.msra.mxu0 0.0
    %738 = vmatprep.subr.mxu0 0.0
    %739 = vmatpush1.msra.mxu0 0.0
    %740 = vmatprep.subr.mxu0 0.0
    %741 = vmatpush1.msra.mxu0 0.0
    %742 = vmatprep.subr.mxu0 0.0
    %743 = vmatpush1.msra.mxu0 0.0
    %744 = vmatprep.subr.mxu0 0.0
    %745 = vmatpush1.msra.mxu0 0.0
    %746 = vmatprep.subr.mxu0 0.0
    %747 = vmatpush1.msra.mxu0 0.0
    %748 = vmatprep.subr.mxu0 0.0
    %749 = vmatpush1.msra.mxu0 0.0
    %750 = vmatprep.subr.mxu0 0.0
    %751 = vmatpush1.msra.mxu0 0.0
    %752 = vmatprep.subr.mxu0 0.0
    %753 = vmatpush1.msra.mxu0 0.0
    %754 = vmatprep.subr.mxu0 0.0
    %755 = vmatpush1.msra.mxu0 0.0
    %756 = vmatprep.subr.mxu0 0.0
    %757 = vmatpush1.msra.mxu0 0.0
    %758 = vmatprep.subr.mxu0 0.0
    %759 = vmatpush1.msra.mxu0 0.0
    %760 = vmatprep.mubr.f32.mxu0 0.0
    %761 = vmatmul.mubr.f32.gmra.mrb[0].mxu0 %v692
    %v762 = vpop.f32.mrb[0].mxu0
    %v763 = vadd.f32 0.0, %v762
    %v764 = vpop.f32.mrb[0].mxu0
    %765 = vdwg.mxu0
    %v766 = vadd.f32 %v695, %v763
    %v767 = vtanh.pop %v766
    %768 = vst [vmem:[%s694] sm:$0xff] %v767
    %s769 = scalar_lea.vmem [#allocation2], 56
    %v770 = vld [vmem:[%s769] sm:$0xff]
    %771 = vmatprep.subr.mxu0 0.0
    %772 = vmatpush1.msra.mxu0 %v85
    %773 = vmatprep.subr.mxu0 0.0
    %774 = vmatpush1.msra.mxu0 %v86
    %775 = vmatprep.subr.mxu0 0.0
    %776 = vmatpush1.msra.mxu0 %v87
    %777 = vmatprep.subr.mxu0 0.0
    %778 = vmatpush1.msra.mxu0 %v88
    %779 = vmatprep.subr.mxu0 0.0
    %780 = vmatpush1.msra.mxu0 %v89
    %781 = vmatprep.subr.mxu0 0.0
    %782 = vmatpush1.msra.mxu0 %v90
    %783 = vmatprep.subr.mxu0 0.0
    %784 = vmatpush1.msra.mxu0 %v91
    %785 = vmatprep.subr.mxu0 0.0
    %786 = vmatpush1.msra.mxu0 %v92
    %787 = vmatprep.subr.mxu0 0.0
    %788 = vmatpush1.msra.mxu0 %v93
    %789 = vmatprep.subr.mxu0 0.0
    %790 = vmatpush1.msra.mxu0 %v94
    %791 = vmatprep.subr.mxu0 0.0
    %792 = vmatpush1.msra.mxu0 %v95
    %793 = vmatprep.subr.mxu0 0.0
    %794 = vmatpush1.msra.mxu0 %v96
    %795 = vmatprep.subr.mxu0 0.0
    %796 = vmatpush1.msra.mxu0 %v97
    %797 = vmatprep.subr.mxu0 0.0
    %798 = vmatpush1.msra.mxu0 %v98
    %799 = vmatprep.subr.mxu0 0.0
    %800 = vmatpush1.msra.mxu0 %v99
    %801 = vmatprep.subr.mxu0 0.0
    %802 = vmatpush1.msra.mxu0 %v100
    %803 = vmatprep.subr.mxu0 0.0
    %804 = vmatpush1.msra.mxu0 0.0
    %805 = vmatprep.subr.mxu0 0.0
    %806 = vmatpush1.msra.mxu0 0.0
    %807 = vmatprep.subr.mxu0 0.0
    %808 = vmatpush1.msra.mxu0 0.0
    %809 = vmatprep.subr.mxu0 0.0
    %810 = vmatpush1.msra.mxu0 0.0
    %811 = vmatprep.subr.mxu0 0.0
    %812 = vmatpush1.msra.mxu0 0.0
    %813 = vmatprep.subr.mxu0 0.0
    %814 = vmatpush1.msra.mxu0 0.0
    %815 = vmatprep.subr.mxu0 0.0
    %816 = vmatpush1.msra.mxu0 0.0
    %817 = vmatprep.subr.mxu0 0.0
    %818 = vmatpush1.msra.mxu0 0.0
    %819 = vmatprep.subr.mxu0 0.0
    %820 = vmatpush1.msra.mxu0 0.0
    %821 = vmatprep.subr.mxu0 0.0
    %822 = vmatpush1.msra.mxu0 0.0
    %823 = vmatprep.subr.mxu0 0.0
    %824 = vmatpush1.msra.mxu0 0.0
    %825 = vmatprep.subr.mxu0 0.0
    %826 = vmatpush1.msra.mxu0 0.0
    %827 = vmatprep.subr.mxu0 0.0
    %828 = vmatpush1.msra.mxu0 0.0
    %829 = vmatprep.subr.mxu0 0.0
    %830 = vmatpush1.msra.mxu0 0.0
    %831 = vmatprep.subr.mxu0 0.0
    %832 = vmatpush1.msra.mxu0 0.0
    %833 = vmatprep.subr.mxu0 0.0
    %834 = vmatpush1.msra.mxu0 0.0
    %835 = vmatprep.mubr.f32.mxu0 0.0
    %836 = vmatmul.mubr.f32.gmra.mrb[0].mxu0 %v767
    %v837 = vpop.f32.mrb[0].mxu0
    %v838 = vadd.f32 0.0, %v837
    %v839 = vpop.f32.mrb[0].mxu0
    %840 = vdwg.mxu0
    %v841 = vadd.f32 %v770, %v838
    %v842 = vtanh.pop %v841
    %843 = vst [vmem:[%s769] sm:$0xff] %v842
    %s844 = scalar_lea.vmem [#allocation8], 128
    %v845 = vld [vmem:[%s844] sm:$0xff]
    %v846 = vld [vmem:[%s844 + $0x8] sm:$0xff]
    %v847 = vld [vmem:[%s844 + $0x10] sm:$0xff]
    %v848 = vld [vmem:[%s844 + $0x18] sm:$0xff]
    %v849 = vld [vmem:[%s844 + $0x20] sm:$0xff]
    %v850 = vld [vmem:[%s844 + $0x28] sm:$0xff]
    %v851 = vld [vmem:[%s844 + $0x30] sm:$0xff]
    %v852 = vld [vmem:[%s844 + $0x38] sm:$0xff]
    %v853 = vld [vmem:[%s844 + $0x40] sm:$0xff]
    %v854 = vld [vmem:[%s844 + $0x48] sm:$0xff]
    %v855 = vld [vmem:[%s844 + $0x50] sm:$0xff]
    %v856 = vld [vmem:[%s844 + $0x58] sm:$0xff]
    %v857 = vld [vmem:[%s844 + $0x60] sm:$0xff]
    %v858 = vld [vmem:[%s844 + $0x68] sm:$0xff]
    %v859 = vld [vmem:[%s844 + $0x70] sm:$0xff]
    %v860 = vld [vmem:[%s844 + $0x78] sm:$0xff]
    %v861 = vld [vmem:[#allocation2] sm:$0xff]
    %v862 = vld [vmem:[#allocation2 + $0x8] sm:$0xff]
    %v863 = vld [vmem:[#allocation2 + $0x10] sm:$0xff]
    %v864 = vld [vmem:[#allocation2 + $0x18] sm:$0xff]
    %v865 = vld [vmem:[#allocation2 + $0x20] sm:$0xff]
    %v866 = vld [vmem:[#allocation2 + $0x28] sm:$0xff]
    %v867 = vld [vmem:[#allocation2 + $0x30] sm:$0xff]
    %v868 = vld [vmem:[#allocation2 + $0x38] sm:$0xff]
    %s869 = scalar_lea.vmem [#allocation6], 128
    %v870 = vld [vmem:[%s869] sm:$0xff]
    %v871 = vld [vmem:[%s869 + $0x8] sm:$0xff]
    %v872 = vld [vmem:[%s869 + $0x10] sm:$0xff]
    %v873 = vld [vmem:[%s869 + $0x18] sm:$0xff]
    %v874 = vld [vmem:[%s869 + $0x20] sm:$0xff]
    %v875 = vld [vmem:[%s869 + $0x28] sm:$0xff]
    %v876 = vld [vmem:[%s869 + $0x30] sm:$0xff]
    %v877 = vld [vmem:[%s869 + $0x38] sm:$0xff]
    %v878 = vld [vmem:[%s869 + $0x40] sm:$0xff]
    %v879 = vld [vmem:[%s869 + $0x48] sm:$0xff]
    %v880 = vld [vmem:[%s869 + $0x50] sm:$0xff]
    %v881 = vld [vmem:[%s869 + $0x58] sm:$0xff]
    %v882 = vld [vmem:[%s869 + $0x60] sm:$0xff]
    %v883 = vld [vmem:[%s869 + $0x68] sm:$0xff]
    %v884 = vld [vmem:[%s869 + $0x70] sm:$0xff]
    %v885 = vld [vmem:[%s869 + $0x78] sm:$0xff]
    %s886 = scalar_lea.vmem %s3, 1
    %v887 = vld [vmem:[%s886] sm:$0x1]
    %v889 = vlaneseq
    %v890 = vshrl.u32 %v889, 7
    %v891 = vsub.s32 0, %v890
    %v892 = vrot.slane %v887, %v891
    %894 = vmatprep.subr.mxu0 0.0
    %895 = vmatpush1.msra.mxu0 %v870
    %896 = vmatprep.subr.mxu0 0.0
    %897 = vmatpush1.msra.mxu0 %v871
    %898 = vmatprep.subr.mxu0 0.0
    %899 = vmatpush1.msra.mxu0 %v872
    %900 = vmatprep.subr.mxu0 0.0
    %901 = vmatpush1.msra.mxu0 %v873
    %902 = vmatprep.subr.mxu0 0.0
    %903 = vmatpush1.msra.mxu0 %v874
    %904 = vmatprep.subr.mxu0 0.0
    %905 = vmatpush1.msra.mxu0 %v875
    %906 = vmatprep.subr.mxu0 0.0
    %907 = vmatpush1.msra.mxu0 %v876
    %908 = vmatprep.subr.mxu0 0.0
    %909 = vmatpush1.msra.mxu0 %v877
    %910 = vmatprep.subr.mxu0 0.0
    %911 = vmatpush1.msra.mxu0 %v878
    %912 = vmatprep.subr.mxu0 0.0
    %913 = vmatpush1.msra.mxu0 %v879
    %914 = vmatprep.subr.mxu0 0.0
    %915 = vmatpush1.msra.mxu0 %v880
    %916 = vmatprep.subr.mxu0 0.0
    %917 = vmatpush1.msra.mxu0 %v881
    %918 = vmatprep.subr.mxu0 0.0
    %919 = vmatpush1.msra.mxu0 %v882
    %920 = vmatprep.subr.mxu0 0.0
    %921 = vmatpush1.msra.mxu0 %v883
    %922 = vmatprep.subr.mxu0 0.0
    %923 = vmatpush1.msra.mxu0 %v884
    %924 = vmatprep.subr.mxu0 0.0
    %925 = vmatpush1.msra.mxu0 %v885
    %926 = vmatprep.subr.mxu0 0.0
    %927 = vmatpush1.msra.mxu0 0.0
    %928 = vmatprep.subr.mxu0 0.0
    %929 = vmatpush1.msra.mxu0 0.0
    %930 = vmatprep.subr.mxu0 0.0
    %931 = vmatpush1.msra.mxu0 0.0
    %932 = vmatprep.subr.mxu0 0.0
    %933 = vmatpush1.msra.mxu0 0.0
    %934 = vmatprep.subr.mxu0 0.0
    %935 = vmatpush1.msra.mxu0 0.0
    %936 = vmatprep.subr.mxu0 0.0
    %937 = vmatpush1.msra.mxu0 0.0
    %938 = vmatprep.subr.mxu0 0.0
    %939 = vmatpush1.msra.mxu0 0.0
    %940 = vmatprep.subr.mxu0 0.0
    %941 = vmatpush1.msra.mxu0 0.0
    %942 = vmatprep.subr.mxu0 0.0
    %943 = vmatpush1.msra.mxu0 0.0
    %944 = vmatprep.subr.mxu0 0.0
    %945 = vmatpush1.msra.mxu0 0.0
    %946 = vmatprep.subr.mxu0 0.0
    %947 = vmatpush1.msra.mxu0 0.0
    %948 = vmatprep.subr.mxu0 0.0
    %949 = vmatpush1.msra.mxu0 0.0
    %950 = vmatprep.subr.mxu0 0.0
    %951 = vmatpush1.msra.mxu0 0.0
    %952 = vmatprep.subr.mxu0 0.0
    %953 = vmatpush1.msra.mxu0 0.0
    %954 = vmatprep.subr.mxu0 0.0
    %955 = vmatpush1.msra.mxu0 0.0
    %956 = vmatprep.subr.mxu0 0.0
    %957 = vmatpush1.msra.mxu0 0.0
    %958 = vmatprep.mubr.f32.mxu0 0.0
    %959 = vmatmul.mubr.f32.gmra.mrb[0].mxu0 %v861
    %v960 = vpop.f32.mrb[0].mxu0
    %v961 = vadd.f32 %v892, %v960
    %v962 = vpop.f32.mrb[0].mxu0
    %963 = vmatprep.mubr.f32.mxu0 0.0
    %964 = vmatmul.mubr.f32.gmra.mrb[0].mxu0 %v862
    %v965 = vpop.f32.mrb[0].mxu0
    %v966 = vadd.f32 %v892, %v965
    %v967 = vpop.f32.mrb[0].mxu0
    %968 = vmatprep.mubr.f32.mxu0 0.0
    %969 = vmatmul.mubr.f32.gmra.mrb[0].mxu0 %v863
    %v970 = vpop.f32.mrb[0].mxu0
    %v971 = vadd.f32 %v892, %v970
    %v972 = vpop.f32.mrb[0].mxu0
    %973 = vmatprep.mubr.f32.mxu0 0.0
    %974 = vmatmul.mubr.f32.gmra.mrb[0].mxu0 %v864
    %v975 = vpop.f32.mrb[0].mxu0
    %v976 = vadd.f32 %v892, %v975
    %v977 = vpop.f32.mrb[0].mxu0
    %978 = vmatprep.mubr.f32.mxu0 0.0
    %979 = vmatmul.mubr.f32.gmra.mrb[0].mxu0 %v865
    %v980 = vpop.f32.mrb[0].mxu0
    %v981 = vadd.f32 %v892, %v980
    %v982 = vpop.f32.mrb[0].mxu0
    %983 = vmatprep.mubr.f32.mxu0 0.0
    %984 = vmatmul.mubr.f32.gmra.mrb[0].mxu0 %v866
    %v985 = vpop.f32.mrb[0].mxu0
    %v986 = vadd.f32 %v892, %v985
    %v987 = vpop.f32.mrb[0].mxu0
    %988 = vmatprep.mubr.f32.mxu0 0.0
    %989 = vmatmul.mubr.f32.gmra.mrb[0].mxu0 %v867
    %v990 = vpop.f32.mrb[0].mxu0
    %v991 = vadd.f32 %v892, %v990
    %v992 = vpop.f32.mrb[0].mxu0
    %993 = vmatprep.mubr.f32.mxu0 0.0
    %994 = vmatmul.mubr.f32.gmra.mrb[0].mxu0 %v868
    %v995 = vpop.f32.mrb[0].mxu0
    %v996 = vadd.f32 %v892, %v995
    %v997 = vpop.f32.mrb[0].mxu0
    %998 = vdwg.mxu0
    %999 = vst [vmem:[#allocation2] sm:$0xff] %v961
    %1000 = vst [vmem:[#allocation2 + $0x8] sm:$0xff] %v966
    %1001 = vst [vmem:[#allocation2 + $0x10] sm:$0xff] %v971
    %1002 = vst [vmem:[#allocation2 + $0x18] sm:$0xff] %v976
    %1003 = vst [vmem:[#allocation2 + $0x20] sm:$0xff] %v981
    %1004 = vst [vmem:[#allocation2 + $0x28] sm:$0xff] %v986
    %1005 = vst [vmem:[#allocation2 + $0x30] sm:$0xff] %v991
    %1006 = vst [vmem:[#allocation2 + $0x38] sm:$0xff] %v996
    %v1007 = vld [vmem:[#allocation2] sm:$0xff]
    %1008 = vmatprep.subr.mxu0 0.0
    %1009 = vmatpush1.msra.mxu0 %v845
    %1010 = vmatprep.subr.mxu0 0.0
    %1011 = vmatpush1.msra.mxu0 %v846
    %1012 = vmatprep.subr.mxu0 0.0
    %1013 = vmatpush1.msra.mxu0 %v847
    %1014 = vmatprep.subr.mxu0 0.0
    %1015 = vmatpush1.msra.mxu0 %v848
    %1016 = vmatprep.subr.mxu0 0.0
    %1017 = vmatpush1.msra.mxu0 %v849
    %1018 = vmatprep.subr.mxu0 0.0
    %1019 = vmatpush1.msra.mxu0 %v850
    %1020 = vmatprep.subr.mxu0 0.0
    %1021 = vmatpush1.msra.mxu0 %v851
    %1022 = vmatprep.subr.mxu0 0.0
    %1023 = vmatpush1.msra.mxu0 %v852
    %1024 = vmatprep.subr.mxu0 0.0
    %1025 = vmatpush1.msra.mxu0 %v853
    %1026 = vmatprep.subr.mxu0 0.0
    %1027 = vmatpush1.msra.mxu0 %v854
    %1028 = vmatprep.subr.mxu0 0.0
    %1029 = vmatpush1.msra.mxu0 %v855
    %1030 = vmatprep.subr.mxu0 0.0
    %1031 = vmatpush1.msra.mxu0 %v856
    %1032 = vmatprep.subr.mxu0 0.0
    %1033 = vmatpush1.msra.mxu0 %v857
    %1034 = vmatprep.subr.mxu0 0.0
    %1035 = vmatpush1.msra.mxu0 %v858
    %1036 = vmatprep.subr.mxu0 0.0
    %1037 = vmatpush1.msra.mxu0 %v859
    %1038 = vmatprep.subr.mxu0 0.0
    %1039 = vmatpush1.msra.mxu0 %v860
    %1040 = vmatprep.subr.mxu0 0.0
    %1041 = vmatpush1.msra.mxu0 0.0
    %1042 = vmatprep.subr.mxu0 0.0
    %1043 = vmatpush1.msra.mxu0 0.0
    %1044 = vmatprep.subr.mxu0 0.0
    %1045 = vmatpush1.msra.mxu0 0.0
    %1046 = vmatprep.subr.mxu0 0.0
    %1047 = vmatpush1.msra.mxu0 0.0
    %1048 = vmatprep.subr.mxu0 0.0
    %1049 = vmatpush1.msra.mxu0 0.0
    %1050 = vmatprep.subr.mxu0 0.0
    %1051 = vmatpush1.msra.mxu0 0.0
    %1052 = vmatprep.subr.mxu0 0.0
    %1053 = vmatpush1.msra.mxu0 0.0
    %1054 = vmatprep.subr.mxu0 0.0
    %1055 = vmatpush1.msra.mxu0 0.0
    %1056 = vmatprep.subr.mxu0 0.0
    %1057 = vmatpush1.msra.mxu0 0.0
    %1058 = vmatprep.subr.mxu0 0.0
    %1059 = vmatpush1.msra.mxu0 0.0
    %1060 = vmatprep.subr.mxu0 0.0
    %1061 = vmatpush1.msra.mxu0 0.0
    %1062 = vmatprep.subr.mxu0 0.0
    %1063 = vmatpush1.msra.mxu0 0.0
    %1064 = vmatprep.subr.mxu0 0.0
    %1065 = vmatpush1.msra.mxu0 0.0
    %1066 = vmatprep.subr.mxu0 0.0
    %1067 = vmatpush1.msra.mxu0 0.0
    %1068 = vmatprep.subr.mxu0 0.0
    %1069 = vmatpush1.msra.mxu0 0.0
    %1070 = vmatprep.subr.mxu0 0.0
    %1071 = vmatpush1.msra.mxu0 0.0
    %1072 = vmatprep.mubr.f32.mxu0 0.0
    %1073 = vmatmul.mubr.f32.gmra.mrb[0].mxu0 0.0
    %v1074 = vpop.f32.mrb[0].mxu0
    %v1075 = vadd.f32 0.0, %v1074
    %v1076 = vpop.f32.mrb[0].mxu0
    %1077 = vdwg.mxu0
    %v1078 = vadd.f32 %v1007, %v1075
    %v1079 = vtanh.pop %v1078
    %v1080 = vld [vmem:[%s319] sm:$0xff]
    %1081 = vmatprep.subr.mxu0 0.0
    %1082 = vmatpush1.msra.mxu0 %v845
    %1083 = vmatprep.subr.mxu0 0.0
    %1084 = vmatpush1.msra.mxu0 %v846
    %1085 = vmatprep.subr.mxu0 0.0
    %1086 = vmatpush1.msra.mxu0 %v847
    %1087 = vmatprep.subr.mxu0 0.0
    %1088 = vmatpush1.msra.mxu0 %v848
    %1089 = vmatprep.subr.mxu0 0.0
    %1090 = vmatpush1.msra.mxu0 %v849
    %1091 = vmatprep.subr.mxu0 0.0
    %1092 = vmatpush1.msra.mxu0 %v850
    %1093 = vmatprep.subr.mxu0 0.0
    %1094 = vmatpush1.msra.mxu0 %v851
    %1095 = vmatprep.subr.mxu0 0.0
    %1096 = vmatpush1.msra.mxu0 %v852
    %1097 = vmatprep.subr.mxu0 0.0
    %1098 = vmatpush1.msra.mxu0 %v853
    %1099 = vmatprep.subr.mxu0 0.0
    %1100 = vmatpush1.msra.mxu0 %v854
    %1101 = vmatprep.subr.mxu0 0.0
    %1102 = vmatpush1.msra.mxu0 %v855
    %1103 = vmatprep.subr.mxu0 0.0
    %1104 = vmatpush1.msra.mxu0 %v856
    %1105 = vmatprep.subr.mxu0 0.0
    %1106 = vmatpush1.msra.mxu0 %v857
    %1107 = vmatprep.subr.mxu0 0.0
    %1108 = vmatpush1.msra.mxu0 %v858
    %1109 = vmatprep.subr.mxu0 0.0
    %1110 = vmatpush1.msra.mxu0 %v859
    %1111 = vmatprep.subr.mxu0 0.0
    %1112 = vmatpush1.msra.mxu0 %v860
    %1113 = vmatprep.subr.mxu0 0.0
    %1114 = vmatpush1.msra.mxu0 0.0
    %1115 = vmatprep.subr.mxu0 0.0
    %1116 = vmatpush1.msra.mxu0 0.0
    %1117 = vmatprep.subr.mxu0 0.0
    %1118 = vmatpush1.msra.mxu0 0.0
    %1119 = vmatprep.subr.mxu0 0.0
    %1120 = vmatpush1.msra.mxu0 0.0
    %1121 = vmatprep.subr.mxu0 0.0
    %1122 = vmatpush1.msra.mxu0 0.0
    %1123 = vmatprep.subr.mxu0 0.0
    %1124 = vmatpush1.msra.mxu0 0.0
    %1125 = vmatprep.subr.mxu0 0.0
    %1126 = vmatpush1.msra.mxu0 0.0
    %1127 = vmatprep.subr.mxu0 0.0
    %1128 = vmatpush1.msra.mxu0 0.0
    %1129 = vmatprep.subr.mxu0 0.0
    %1130 = vmatpush1.msra.mxu0 0.0
    %1131 = vmatprep.subr.mxu0 0.0
    %1132 = vmatpush1.msra.mxu0 0.0
    %1133 = vmatprep.subr.mxu0 0.0
    %1134 = vmatpush1.msra.mxu0 0.0
    %1135 = vmatprep.subr.mxu0 0.0
    %1136 = vmatpush1.msra.mxu0 0.0
    %1137 = vmatprep.subr.mxu0 0.0
    %1138 = vmatpush1.msra.mxu0 0.0
    %1139 = vmatprep.subr.mxu0 0.0
    %1140 = vmatpush1.msra.mxu0 0.0
    %1141 = vmatprep.subr.mxu0 0.0
    %1142 = vmatpush1.msra.mxu0 0.0
    %1143 = vmatprep.subr.mxu0 0.0
    %1144 = vmatpush1.msra.mxu0 0.0
    %1145 = vmatprep.mubr.f32.mxu0 0.0
    %1146 = vmatmul.mubr.f32.gmra.mrb[0].mxu0 %v1079
    %v1147 = vpop.f32.mrb[0].mxu0
    %v1148 = vadd.f32 0.0, %v1147
    %v1149 = vpop.f32.mrb[0].mxu0
    %1150 = vdwg.mxu0
    %v1151 = vadd.f32 %v1080, %v1148
    %v1152 = vtanh.pop %v1151
    %v1153 = vld [vmem:[%s394] sm:$0xff]
    %1154 = vmatprep.subr.mxu0 0.0
    %1155 = vmatpush1.msra.mxu0 %v845
    %1156 = vmatprep.subr.mxu0 0.0
    %1157 = vmatpush1.msra.mxu0 %v846
    %1158 = vmatprep.subr.mxu0 0.0
    %1159 = vmatpush1.msra.mxu0 %v847
    %1160 = vmatprep.subr.mxu0 0.0
    %1161 = vmatpush1.msra.mxu0 %v848
    %1162 = vmatprep.subr.mxu0 0.0
    %1163 = vmatpush1.msra.mxu0 %v849
    %1164 = vmatprep.subr.mxu0 0.0
    %1165 = vmatpush1.msra.mxu0 %v850
    %1166 = vmatprep.subr.mxu0 0.0
    %1167 = vmatpush1.msra.mxu0 %v851
    %1168 = vmatprep.subr.mxu0 0.0
    %1169 = vmatpush1.msra.mxu0 %v852
    %1170 = vmatprep.subr.mxu0 0.0
    %1171 = vmatpush1.msra.mxu0 %v853
    %1172 = vmatprep.subr.mxu0 0.0
    %1173 = vmatpush1.msra.mxu0 %v854
    %1174 = vmatprep.subr.mxu0 0.0
    %1175 = vmatpush1.msra.mxu0 %v855
    %1176 = vmatprep.subr.mxu0 0.0
    %1177 = vmatpush1.msra.mxu0 %v856
    %1178 = vmatprep.subr.mxu0 0.0
    %1179 = vmatpush1.msra.mxu0 %v857
    %1180 = vmatprep.subr.mxu0 0.0
    %1181 = vmatpush1.msra.mxu0 %v858
    %1182 = vmatprep.subr.mxu0 0.0
    %1183 = vmatpush1.msra.mxu0 %v859
    %1184 = vmatprep.subr.mxu0 0.0
    %1185 = vmatpush1.msra.mxu0 %v860
    %1186 = vmatprep.subr.mxu0 0.0
    %1187 = vmatpush1.msra.mxu0 0.0
    %1188 = vmatprep.subr.mxu0 0.0
    %1189 = vmatpush1.msra.mxu0 0.0
    %1190 = vmatprep.subr.mxu0 0.0
    %1191 = vmatpush1.msra.mxu0 0.0
    %1192 = vmatprep.subr.mxu0 0.0
    %1193 = vmatpush1.msra.mxu0 0.0
    %1194 = vmatprep.subr.mxu0 0.0
    %1195 = vmatpush1.msra.mxu0 0.0
    %1196 = vmatprep.subr.mxu0 0.0
    %1197 = vmatpush1.msra.mxu0 0.0
    %1198 = vmatprep.subr.mxu0 0.0
    %1199 = vmatpush1.msra.mxu0 0.0
    %1200 = vmatprep.subr.mxu0 0.0
    %1201 = vmatpush1.msra.mxu0 0.0
    %1202 = vmatprep.subr.mxu0 0.0
    %1203 = vmatpush1.msra.mxu0 0.0
    %1204 = vmatprep.subr.mxu0 0.0
    %1205 = vmatpush1.msra.mxu0 0.0
    %1206 = vmatprep.subr.mxu0 0.0
    %1207 = vmatpush1.msra.mxu0 0.0
    %1208 = vmatprep.subr.mxu0 0.0
    %1209 = vmatpush1.msra.mxu0 0.0
    %1210 = vmatprep.subr.mxu0 0.0
    %1211 = vmatpush1.msra.mxu0 0.0
    %1212 = vmatprep.subr.mxu0 0.0
    %1213 = vmatpush1.msra.mxu0 0.0
    %1214 = vmatprep.subr.mxu0 0.0
    %1215 = vmatpush1.msra.mxu0 0.0
    %1216 = vmatprep.subr.mxu0 0.0
    %1217 = vmatpush1.msra.mxu0 0.0
    %1218 = vmatprep.mubr.f32.mxu0 0.0
    %1219 = vmatmul.mubr.f32.gmra.mrb[0].mxu0 %v1152
    %v1220 = vpop.f32.mrb[0].mxu0
    %v1221 = vadd.f32 0.0, %v1220
    %v1222 = vpop.f32.mrb[0].mxu0
    %1223 = vdwg.mxu0
    %v1224 = vadd.f32 %v1153, %v1221
    %v1225 = vtanh.pop %v1224
    %v1226 = vld [vmem:[%s469] sm:$0xff]
    %1227 = vmatprep.subr.mxu0 0.0
    %1228 = vmatpush1.msra.mxu0 %v845
    %1229 = vmatprep.subr.mxu0 0.0
    %1230 = vmatpush1.msra.mxu0 %v846
    %1231 = vmatprep.subr.mxu0 0.0
    %1232 = vmatpush1.msra.mxu0 %v847
    %1233 = vmatprep.subr.mxu0 0.0
    %1234 = vmatpush1.msra.mxu0 %v848
    %1235 = vmatprep.subr.mxu0 0.0
    %1236 = vmatpush1.msra.mxu0 %v849
    %1237 = vmatprep.subr.mxu0 0.0
    %1238 = vmatpush1.msra.mxu0 %v850
    %1239 = vmatprep.subr.mxu0 0.0
    %1240 = vmatpush1.msra.mxu0 %v851
    %1241 = vmatprep.subr.mxu0 0.0
    %1242 = vmatpush1.msra.mxu0 %v852
    %1243 = vmatprep.subr.mxu0 0.0
    %1244 = vmatpush1.msra.mxu0 %v853
    %1245 = vmatprep.subr.mxu0 0.0
    %1246 = vmatpush1.msra.mxu0 %v854
    %1247 = vmatprep.subr.mxu0 0.0
    %1248 = vmatpush1.msra.mxu0 %v855
    %1249 = vmatprep.subr.mxu0 0.0
    %1250 = vmatpush1.msra.mxu0 %v856
    %1251 = vmatprep.subr.mxu0 0.0
    %1252 = vmatpush1.msra.mxu0 %v857
    %1253 = vmatprep.subr.mxu0 0.0
    %1254 = vmatpush1.msra.mxu0 %v858
    %1255 = vmatprep.subr.mxu0 0.0
    %1256 = vmatpush1.msra.mxu0 %v859
    %1257 = vmatprep.subr.mxu0 0.0
    %1258 = vmatpush1.msra.mxu0 %v860
    %1259 = vmatprep.subr.mxu0 0.0
    %1260 = vmatpush1.msra.mxu0 0.0
    %1261 = vmatprep.subr.mxu0 0.0
    %1262 = vmatpush1.msra.mxu0 0.0
    %1263 = vmatprep.subr.mxu0 0.0
    %1264 = vmatpush1.msra.mxu0 0.0
    %1265 = vmatprep.subr.mxu0 0.0
    %1266 = vmatpush1.msra.mxu0 0.0
    %1267 = vmatprep.subr.mxu0 0.0
    %1268 = vmatpush1.msra.mxu0 0.0
    %1269 = vmatprep.subr.mxu0 0.0
    %1270 = vmatpush1.msra.mxu0 0.0
    %1271 = vmatprep.subr.mxu0 0.0
    %1272 = vmatpush1.msra.mxu0 0.0
    %1273 = vmatprep.subr.mxu0 0.0
    %1274 = vmatpush1.msra.mxu0 0.0
    %1275 = vmatprep.subr.mxu0 0.0
    %1276 = vmatpush1.msra.mxu0 0.0
    %1277 = vmatprep.subr.mxu0 0.0
    %1278 = vmatpush1.msra.mxu0 0.0
    %1279 = vmatprep.subr.mxu0 0.0
    %1280 = vmatpush1.msra.mxu0 0.0
    %1281 = vmatprep.subr.mxu0 0.0
    %1282 = vmatpush1.msra.mxu0 0.0
    %1283 = vmatprep.subr.mxu0 0.0
    %1284 = vmatpush1.msra.mxu0 0.0
    %1285 = vmatprep.subr.mxu0 0.0
    %1286 = vmatpush1.msra.mxu0 0.0
    %1287 = vmatprep.subr.mxu0 0.0
    %1288 = vmatpush1.msra.mxu0 0.0
    %1289 = vmatprep.subr.mxu0 0.0
    %1290 = vmatpush1.msra.mxu0 0.0
    %1291 = vmatprep.mubr.f32.mxu0 0.0
    %1292 = vmatmul.mubr.f32.gmra.mrb[0].mxu0 %v1225
    %v1293 = vpop.f32.mrb[0].mxu0
    %v1294 = vadd.f32 0.0, %v1293
    %v1295 = vpop.f32.mrb[0].mxu0
    %1296 = vdwg.mxu0
    %v1297 = vadd.f32 %v1226, %v1294
    %v1298 = vtanh.pop %v1297
    %v1299 = vld [vmem:[%s544] sm:$0xff]
    %1300 = vmatprep.subr.mxu0 0.0
    %1301 = vmatpush1.msra.mxu0 %v845
    %1302 = vmatprep.subr.mxu0 0.0
    %1303 = vmatpush1.msra.mxu0 %v846
    %1304 = vmatprep.subr.mxu0 0.0
    %1305 = vmatpush1.msra.mxu0 %v847
    %1306 = vmatprep.subr.mxu0 0.0
    %1307 = vmatpush1.msra.mxu0 %v848
    %1308 = vmatprep.subr.mxu0 0.0
    %1309 = vmatpush1.msra.mxu0 %v849
    %1310 = vmatprep.subr.mxu0 0.0
    %1311 = vmatpush1.msra.mxu0 %v850
    %1312 = vmatprep.subr.mxu0 0.0
    %1313 = vmatpush1.msra.mxu0 %v851
    %1314 = vmatprep.subr.mxu0 0.0
    %1315 = vmatpush1.msra.mxu0 %v852
    %1316 = vmatprep.subr.mxu0 0.0
    %1317 = vmatpush1.msra.mxu0 %v853
    %1318 = vmatprep.subr.mxu0 0.0
    %1319 = vmatpush1.msra.mxu0 %v854
    %1320 = vmatprep.subr.mxu0 0.0
    %1321 = vmatpush1.msra.mxu0 %v855
    %1322 = vmatprep.subr.mxu0 0.0
    %1323 = vmatpush1.msra.mxu0 %v856
    %1324 = vmatprep.subr.mxu0 0.0
    %1325 = vmatpush1.msra.mxu0 %v857
    %1326 = vmatprep.subr.mxu0 0.0
    %1327 = vmatpush1.msra.mxu0 %v858
    %1328 = vmatprep.subr.mxu0 0.0
    %1329 = vmatpush1.msra.mxu0 %v859
    %1330 = vmatprep.subr.mxu0 0.0
    %1331 = vmatpush1.msra.mxu0 %v860
    %1332 = vmatprep.subr.mxu0 0.0
    %1333 = vmatpush1.msra.mxu0 0.0
    %1334 = vmatprep.subr.mxu0 0.0
    %1335 = vmatpush1.msra.mxu0 0.0
    %1336 = vmatprep.subr.mxu0 0.0
    %1337 = vmatpush1.msra.mxu0 0.0
    %1338 = vmatprep.subr.mxu0 0.0
    %1339 = vmatpush1.msra.mxu0 0.0
    %1340 = vmatprep.subr.mxu0 0.0
    %1341 = vmatpush1.msra.mxu0 0.0
    %1342 = vmatprep.subr.mxu0 0.0
    %1343 = vmatpush1.msra.mxu0 0.0
    %1344 = vmatprep.subr.mxu0 0.0
    %1345 = vmatpush1.msra.mxu0 0.0
    %1346 = vmatprep.subr.mxu0 0.0
    %1347 = vmatpush1.msra.mxu0 0.0
    %1348 = vmatprep.subr.mxu0 0.0
    %1349 = vmatpush1.msra.mxu0 0.0
    %1350 = vmatprep.subr.mxu0 0.0
    %1351 = vmatpush1.msra.mxu0 0.0
    %1352 = vmatprep.subr.mxu0 0.0
    %1353 = vmatpush1.msra.mxu0 0.0
    %1354 = vmatprep.subr.mxu0 0.0
    %1355 = vmatpush1.msra.mxu0 0.0
    %1356 = vmatprep.subr.mxu0 0.0
    %1357 = vmatpush1.msra.mxu0 0.0
    %1358 = vmatprep.subr.mxu0 0.0
    %1359 = vmatpush1.msra.mxu0 0.0
    %1360 = vmatprep.subr.mxu0 0.0
    %1361 = vmatpush1.msra.mxu0 0.0
    %1362 = vmatprep.subr.mxu0 0.0
    %1363 = vmatpush1.msra.mxu0 0.0
    %1364 = vmatprep.mubr.f32.mxu0 0.0
    %1365 = vmatmul.mubr.f32.gmra.mrb[0].mxu0 %v1298
    %v1366 = vpop.f32.mrb[0].mxu0
    %v1367 = vadd.f32 0.0, %v1366
    %v1368 = vpop.f32.mrb[0].mxu0
    %1369 = vdwg.mxu0
    %v1370 = vadd.f32 %v1299, %v1367
    %v1371 = vtanh.pop %v1370
    %v1372 = vld [vmem:[%s619] sm:$0xff]
    %1373 = vmatprep.subr.mxu0 0.0
    %1374 = vmatpush1.msra.mxu0 %v845
    %1375 = vmatprep.subr.mxu0 0.0
    %1376 = vmatpush1.msra.mxu0 %v846
    %1377 = vmatprep.subr.mxu0 0.0
    %1378 = vmatpush1.msra.mxu0 %v847
    %1379 = vmatprep.subr.mxu0 0.0
    %1380 = vmatpush1.msra.mxu0 %v848
    %1381 = vmatprep.subr.mxu0 0.0
    %1382 = vmatpush1.msra.mxu0 %v849
    %1383 = vmatprep.subr.mxu0 0.0
    %1384 = vmatpush1.msra.mxu0 %v850
    %1385 = vmatprep.subr.mxu0 0.0
    %1386 = vmatpush1.msra.mxu0 %v851
    %1387 = vmatprep.subr.mxu0 0.0
    %1388 = vmatpush1.msra.mxu0 %v852
    %1389 = vmatprep.subr.mxu0 0.0
    %1390 = vmatpush1.msra.mxu0 %v853
    %1391 = vmatprep.subr.mxu0 0.0
    %1392 = vmatpush1.msra.mxu0 %v854
    %1393 = vmatprep.subr.mxu0 0.0
    %1394 = vmatpush1.msra.mxu0 %v855
    %1395 = vmatprep.subr.mxu0 0.0
    %1396 = vmatpush1.msra.mxu0 %v856
    %1397 = vmatprep.subr.mxu0 0.0
    %1398 = vmatpush1.msra.mxu0 %v857
    %1399 = vmatprep.subr.mxu0 0.0
    %1400 = vmatpush1.msra.mxu0 %v858
    %1401 = vmatprep.subr.mxu0 0.0
    %1402 = vmatpush1.msra.mxu0 %v859
    %1403 = vmatprep.subr.mxu0 0.0
    %1404 = vmatpush1.msra.mxu0 %v860
    %1405 = vmatprep.subr.mxu0 0.0
    %1406 = vmatpush1.msra.mxu0 0.0
    %1407 = vmatprep.subr.mxu0 0.0
    %1408 = vmatpush1.msra.mxu0 0.0
    %1409 = vmatprep.subr.mxu0 0.0
    %1410 = vmatpush1.msra.mxu0 0.0
    %1411 = vmatprep.subr.mxu0 0.0
    %1412 = vmatpush1.msra.mxu0 0.0
    %1413 = vmatprep.subr.mxu0 0.0
    %1414 = vmatpush1.msra.mxu0 0.0
    %1415 = vmatprep.subr.mxu0 0.0
    %1416 = vmatpush1.msra.mxu0 0.0
    %1417 = vmatprep.subr.mxu0 0.0
    %1418 = vmatpush1.msra.mxu0 0.0
    %1419 = vmatprep.subr.mxu0 0.0
    %1420 = vmatpush1.msra.mxu0 0.0
    %1421 = vmatprep.subr.mxu0 0.0
    %1422 = vmatpush1.msra.mxu0 0.0
    %1423 = vmatprep.subr.mxu0 0.0
    %1424 = vmatpush1.msra.mxu0 0.0
    %1425 = vmatprep.subr.mxu0 0.0
    %1426 = vmatpush1.msra.mxu0 0.0
    %1427 = vmatprep.subr.mxu0 0.0
    %1428 = vmatpush1.msra.mxu0 0.0
    %1429 = vmatprep.subr.mxu0 0.0
    %1430 = vmatpush1.msra.mxu0 0.0
    %1431 = vmatprep.subr.mxu0 0.0
    %1432 = vmatpush1.msra.mxu0 0.0
    %1433 = vmatprep.subr.mxu0 0.0
    %1434 = vmatpush1.msra.mxu0 0.0
    %1435 = vmatprep.subr.mxu0 0.0
    %1436 = vmatpush1.msra.mxu0 0.0
    %1437 = vmatprep.mubr.f32.mxu0 0.0
    %1438 = vmatmul.mubr.f32.gmra.mrb[0].mxu0 %v1371
    %v1439 = vpop.f32.mrb[0].mxu0
    %v1440 = vadd.f32 0.0, %v1439
    %v1441 = vpop.f32.mrb[0].mxu0
    %1442 = vdwg.mxu0
    %v1443 = vadd.f32 %v1372, %v1440
    %v1444 = vtanh.pop %v1443
    %v1445 = vld [vmem:[%s694] sm:$0xff]
    %1446 = vmatprep.subr.mxu0 0.0
    %1447 = vmatpush1.msra.mxu0 %v845
    %1448 = vmatprep.subr.mxu0 0.0
    %1449 = vmatpush1.msra.mxu0 %v846
    %1450 = vmatprep.subr.mxu0 0.0
    %1451 = vmatpush1.msra.mxu0 %v847
    %1452 = vmatprep.subr.mxu0 0.0
    %1453 = vmatpush1.msra.mxu0 %v848
    %1454 = vmatprep.subr.mxu0 0.0
    %1455 = vmatpush1.msra.mxu0 %v849
    %1456 = vmatprep.subr.mxu0 0.0
    %1457 = vmatpush1.msra.mxu0 %v850
    %1458 = vmatprep.subr.mxu0 0.0
    %1459 = vmatpush1.msra.mxu0 %v851
    %1460 = vmatprep.subr.mxu0 0.0
    %1461 = vmatpush1.msra.mxu0 %v852
    %1462 = vmatprep.subr.mxu0 0.0
    %1463 = vmatpush1.msra.mxu0 %v853
    %1464 = vmatprep.subr.mxu0 0.0
    %1465 = vmatpush1.msra.mxu0 %v854
    %1466 = vmatprep.subr.mxu0 0.0
    %1467 = vmatpush1.msra.mxu0 %v855
    %1468 = vmatprep.subr.mxu0 0.0
    %1469 = vmatpush1.msra.mxu0 %v856
    %1470 = vmatprep.subr.mxu0 0.0
    %1471 = vmatpush1.msra.mxu0 %v857
    %1472 = vmatprep.subr.mxu0 0.0
    %1473 = vmatpush1.msra.mxu0 %v858
    %1474 = vmatprep.subr.mxu0 0.0
    %1475 = vmatpush1.msra.mxu0 %v859
    %1476 = vmatprep.subr.mxu0 0.0
    %1477 = vmatpush1.msra.mxu0 %v860
    %1478 = vmatprep.subr.mxu0 0.0
    %1479 = vmatpush1.msra.mxu0 0.0
    %1480 = vmatprep.subr.mxu0 0.0
    %1481 = vmatpush1.msra.mxu0 0.0
    %1482 = vmatprep.subr.mxu0 0.0
    %1483 = vmatpush1.msra.mxu0 0.0
    %1484 = vmatprep.subr.mxu0 0.0
    %1485 = vmatpush1.msra.mxu0 0.0
    %1486 = vmatprep.subr.mxu0 0.0
    %1487 = vmatpush1.msra.mxu0 0.0
    %1488 = vmatprep.subr.mxu0 0.0
    %1489 = vmatpush1.msra.mxu0 0.0
    %1490 = vmatprep.subr.mxu0 0.0
    %1491 = vmatpush1.msra.mxu0 0.0
    %1492 = vmatprep.subr.mxu0 0.0
    %1493 = vmatpush1.msra.mxu0 0.0
    %1494 = vmatprep.subr.mxu0 0.0
    %1495 = vmatpush1.msra.mxu0 0.0
    %1496 = vmatprep.subr.mxu0 0.0
    %1497 = vmatpush1.msra.mxu0 0.0
    %1498 = vmatprep.subr.mxu0 0.0
    %1499 = vmatpush1.msra.mxu0 0.0
    %1500 = vmatprep.subr.mxu0 0.0
    %1501 = vmatpush1.msra.mxu0 0.0
    %1502 = vmatprep.subr.mxu0 0.0
    %1503 = vmatpush1.msra.mxu0 0.0
    %1504 = vmatprep.subr.mxu0 0.0
    %1505 = vmatpush1.msra.mxu0 0.0
    %1506 = vmatprep.subr.mxu0 0.0
    %1507 = vmatpush1.msra.mxu0 0.0
    %1508 = vmatprep.subr.mxu0 0.0
    %1509 = vmatpush1.msra.mxu0 0.0
    %1510 = vmatprep.mubr.f32.mxu0 0.0
    %1511 = vmatmul.mubr.f32.gmra.mrb[0].mxu0 %v1444
    %v1512 = vpop.f32.mrb[0].mxu0
    %v1513 = vadd.f32 0.0, %v1512
    %v1514 = vpop.f32.mrb[0].mxu0
    %1515 = vdwg.mxu0
    %v1516 = vadd.f32 %v1445, %v1513
    %v1517 = vtanh.pop %v1516
    %v1518 = vld [vmem:[%s769] sm:$0xff]
    %1519 = vmatprep.subr.mxu0 0.0
    %1520 = vmatpush1.msra.mxu0 %v845
    %1521 = vmatprep.subr.mxu0 0.0
    %1522 = vmatpush1.msra.mxu0 %v846
    %1523 = vmatprep.subr.mxu0 0.0
    %1524 = vmatpush1.msra.mxu0 %v847
    %1525 = vmatprep.subr.mxu0 0.0
    %1526 = vmatpush1.msra.mxu0 %v848
    %1527 = vmatprep.subr.mxu0 0.0
    %1528 = vmatpush1.msra.mxu0 %v849
    %1529 = vmatprep.subr.mxu0 0.0
    %1530 = vmatpush1.msra.mxu0 %v850
    %1531 = vmatprep.subr.mxu0 0.0
    %1532 = vmatpush1.msra.mxu0 %v851
    %1533 = vmatprep.subr.mxu0 0.0
    %1534 = vmatpush1.msra.mxu0 %v852
    %1535 = vmatprep.subr.mxu0 0.0
    %1536 = vmatpush1.msra.mxu0 %v853
    %1537 = vmatprep.subr.mxu0 0.0
    %1538 = vmatpush1.msra.mxu0 %v854
    %1539 = vmatprep.subr.mxu0 0.0
    %1540 = vmatpush1.msra.mxu0 %v855
    %1541 = vmatprep.subr.mxu0 0.0
    %1542 = vmatpush1.msra.mxu0 %v856
    %1543 = vmatprep.subr.mxu0 0.0
    %1544 = vmatpush1.msra.mxu0 %v857
    %1545 = vmatprep.subr.mxu0 0.0
    %1546 = vmatpush1.msra.mxu0 %v858
    %1547 = vmatprep.subr.mxu0 0.0
    %1548 = vmatpush1.msra.mxu0 %v859
    %1549 = vmatprep.subr.mxu0 0.0
    %1550 = vmatpush1.msra.mxu0 %v860
    %1551 = vmatprep.subr.mxu0 0.0
    %1552 = vmatpush1.msra.mxu0 0.0
    %1553 = vmatprep.subr.mxu0 0.0
    %1554 = vmatpush1.msra.mxu0 0.0
    %1555 = vmatprep.subr.mxu0 0.0
    %1556 = vmatpush1.msra.mxu0 0.0
    %1557 = vmatprep.subr.mxu0 0.0
    %1558 = vmatpush1.msra.mxu0 0.0
    %1559 = vmatprep.subr.mxu0 0.0
    %1560 = vmatpush1.msra.mxu0 0.0
    %1561 = vmatprep.subr.mxu0 0.0
    %1562 = vmatpush1.msra.mxu0 0.0
    %1563 = vmatprep.subr.mxu0 0.0
    %1564 = vmatpush1.msra.mxu0 0.0
    %1565 = vmatprep.subr.mxu0 0.0
    %1566 = vmatpush1.msra.mxu0 0.0
    %1567 = vmatprep.subr.mxu0 0.0
    %1568 = vmatpush1.msra.mxu0 0.0
    %1569 = vmatprep.subr.mxu0 0.0
    %1570 = vmatpush1.msra.mxu0 0.0
    %1571 = vmatprep.subr.mxu0 0.0
    %1572 = vmatpush1.msra.mxu0 0.0
    %1573 = vmatprep.subr.mxu0 0.0
    %1574 = vmatpush1.msra.mxu0 0.0
    %1575 = vmatprep.subr.mxu0 0.0
    %1576 = vmatpush1.msra.mxu0 0.0
    %1577 = vmatprep.subr.mxu0 0.0
    %1578 = vmatpush1.msra.mxu0 0.0
    %1579 = vmatprep.subr.mxu0 0.0
    %1580 = vmatpush1.msra.mxu0 0.0
    %1581 = vmatprep.subr.mxu0 0.0
    %1582 = vmatpush1.msra.mxu0 0.0
    %1583 = vmatprep.mubr.f32.mxu0 0.0
    %1584 = vmatmul.mubr.f32.gmra.mrb[0].mxu0 %v1517
    %v1585 = vpop.f32.mrb[0].mxu0
    %v1586 = vadd.f32 0.0, %v1585
    %v1587 = vpop.f32.mrb[0].mxu0
    %1588 = vdwg.mxu0
    %v1589 = vadd.f32 %v1518, %v1586
    %v1590 = vtanh.pop %v1589
    %1591 = vadd.xlane.f32.xlu0 %v1590
    %v1592 = vpop.xlane.xlu0 %1591
    %v1593 = vmul.f32 %v1592, 0.03125
    %v1594 = vmul.f32 %v1590, %v1590
    %1595 = vadd.xlane.f32.xlu0 %v1594
    %v1596 = vpop.xlane.xlu0 %1595
    %v1597 = vmul.f32 %v1596, 0.03125
    %v1598 = vmul.f32 %v1593, %v1593
    %v1599 = vsub.f32 %v1597, %v1598
    %v1600 = vsub.f32 %v1590, %v1593
    %v1601 = vadd.f32 %v1599, 1e-05
    %v1602 = vrsqrt.pop %v1601
    %v1603 = vmul.f32 %v1600, %v1602
    %v1604 = vld [vmem:[%s4] sm:$0x1]
    %v1606 = vlaneseq
    %v1607 = vshrl.u32 %v1606, 7
    %v1608 = vsub.s32 0, %v1607
    %v1609 = vrot.slane %v1604, %v1608
    %v1611 = vmul.f32 %v1603, %v1609
    %v1612 = vld [vmem:[%s5] sm:$0x1]
    %v1614 = vlaneseq
    %v1615 = vshrl.u32 %v1614, 7
    %v1616 = vsub.s32 0, %v1615
    %v1617 = vrot.slane %v1612, %v1616
    %v1619 = vadd.f32 %v1611, %v1617
    %v1620 = vld [vmem:[#allocation9] sm:$0xff]
    %v1621 = vld [vmem:[#allocation9 + $0x8] sm:$0xff]
    %v1622 = vld [vmem:[#allocation9 + $0x10] sm:$0xff]
    %v1623 = vld [vmem:[#allocation9 + $0x18] sm:$0xff]
    %v1624 = vld [vmem:[#allocation9 + $0x20] sm:$0xff]
    %v1625 = vld [vmem:[#allocation9 + $0x28] sm:$0xff]
    %v1626 = vld [vmem:[#allocation9 + $0x30] sm:$0xff]
    %v1627 = vld [vmem:[#allocation9 + $0x38] sm:$0xff]
    %v1628 = vld [vmem:[#allocation9 + $0x40] sm:$0xff]
    %v1629 = vld [vmem:[#allocation9 + $0x48] sm:$0xff]
    %v1630 = vld [vmem:[#allocation9 + $0x50] sm:$0xff]
    %v1631 = vld [vmem:[#allocation9 + $0x58] sm:$0xff]
    %v1632 = vld [vmem:[#allocation9 + $0x60] sm:$0xff]
    %v1633 = vld [vmem:[#allocation9 + $0x68] sm:$0xff]
    %v1634 = vld [vmem:[#allocation9 + $0x70] sm:$0xff]
    %v1635 = vld [vmem:[#allocation9 + $0x78] sm:$0xff]
    %v1636 = vld [vmem:[%s7] sm:$0x1]
    %v1638 = vlaneseq
    %v1639 = vshrl.u32 %v1638, 7
    %v1640 = vsub.s32 0, %v1639
    %v1641 = vrot.slane %v1636, %v1640
    %1643 = vmatprep.subr.mxu0 0.0
    %1644 = vmatpush1.msra.mxu0 %v1620
    %1645 = vmatprep.subr.mxu0 0.0
    %1646 = vmatpush1.msra.mxu0 %v1621
    %1647 = vmatprep.subr.mxu0 0.0
    %1648 = vmatpush1.msra.mxu0 %v1622
    %1649 = vmatprep.subr.mxu0 0.0
    %1650 = vmatpush1.msra.mxu0 %v1623
    %1651 = vmatprep.subr.mxu0 0.0
    %1652 = vmatpush1.msra.mxu0 %v1624
    %1653 = vmatprep.subr.mxu0 0.0
    %1654 = vmatpush1.msra.mxu0 %v1625
    %1655 = vmatprep.subr.mxu0 0.0
    %1656 = vmatpush1.msra.mxu0 %v1626
    %1657 = vmatprep.subr.mxu0 0.0
    %1658 = vmatpush1.msra.mxu0 %v1627
    %1659 = vmatprep.subr.mxu0 0.0
    %1660 = vmatpush1.msra.mxu0 %v1628
    %1661 = vmatprep.subr.mxu0 0.0
    %1662 = vmatpush1.msra.mxu0 %v1629
    %1663 = vmatprep.subr.mxu0 0.0
    %1664 = vmatpush1.msra.mxu0 %v1630
    %1665 = vmatprep.subr.mxu0 0.0
    %1666 = vmatpush1.msra.mxu0 %v1631
    %1667 = vmatprep.subr.mxu0 0.0
    %1668 = vmatpush1.msra.mxu0 %v1632
    %1669 = vmatprep.subr.mxu0 0.0
    %1670 = vmatpush1.msra.mxu0 %v1633
    %1671 = vmatprep.subr.mxu0 0.0
    %1672 = vmatpush1.msra.mxu0 %v1634
    %1673 = vmatprep.subr.mxu0 0.0
    %1674 = vmatpush1.msra.mxu0 %v1635
    %1675 = vmatprep.subr.mxu0 0.0
    %1676 = vmatpush1.msra.mxu0 0.0
    %1677 = vmatprep.subr.mxu0 0.0
    %1678 = vmatpush1.msra.mxu0 0.0
    %1679 = vmatprep.subr.mxu0 0.0
    %1680 = vmatpush1.msra.mxu0 0.0
    %1681 = vmatprep.subr.mxu0 0.0
    %1682 = vmatpush1.msra.mxu0 0.0
    %1683 = vmatprep.subr.mxu0 0.0
    %1684 = vmatpush1.msra.mxu0 0.0
    %1685 = vmatprep.subr.mxu0 0.0
    %1686 = vmatpush1.msra.mxu0 0.0
    %1687 = vmatprep.subr.mxu0 0.0
    %1688 = vmatpush1.msra.mxu0 0.0
    %1689 = vmatprep.subr.mxu0 0.0
    %1690 = vmatpush1.msra.mxu0 0.0
    %1691 = vmatprep.subr.mxu0 0.0
    %1692 = vmatpush1.msra.mxu0 0.0
    %1693 = vmatprep.subr.mxu0 0.0
    %1694 = vmatpush1.msra.mxu0 0.0
    %1695 = vmatprep.subr.mxu0 0.0
    %1696 = vmatpush1.msra.mxu0 0.0
    %1697 = vmatprep.subr.mxu0 0.0
    %1698 = vmatpush1.msra.mxu0 0.0
    %1699 = vmatprep.subr.mxu0 0.0
    %1700 = vmatpush1.msra.mxu0 0.0
    %1701 = vmatprep.subr.mxu0 0.0
    %1702 = vmatpush1.msra.mxu0 0.0
    %1703 = vmatprep.subr.mxu0 0.0
    %1704 = vmatpush1.msra.mxu0 0.0
    %1705 = vmatprep.subr.mxu0 0.0
    %1706 = vmatpush1.msra.mxu0 0.0
    %1707 = vmatprep.mubr.f32.mxu0 0.0
    %1708 = vmatmul.mubr.f32.gmra.mrb[0].mxu0 %v1619
    %v1709 = vpop.f32.mrb[0].mxu0
    %v1710 = vadd.f32 %v1641, %v1709
    %v1711 = vpop.f32.mrb[0].mxu0
    %1712 = vdwg.mxu0
    %1713 = vst [vmem:[#allocation11] sm:$0xff] %v1710
    // Predicated region
    $region50: #{tpu_custom_call.1} parent=1 // pred_check
      _
    $region51: #{tpu_custom_call.1} parent=1 // pred_check_branch
      %1715 = sbr.rel (0) target = $region53
    $region52: #{tpu_custom_call.1} parent=1 // pred_region
      %s1717 = ssub.s32 128, 128
      %1718 = vsyncadd [#allocation5], %s1717
      %s1720 = sshll.u32 [#allocation11], 4
      %s1721 = int_to_ptr.vmem [resolvable:$true] %s1720
      %1723 = dma.vmem_to_hbm [thread:$0]  %s1721, 128, %s8, [#allocation5]
    $region53: #{tpu_custom_call.1} parent=1 // pred_fallthru
      _
    // Predicated region
    $region54: #{tpu_custom_call.1} parent=1 // pred_check
      _
    $region55: #{tpu_custom_call.1} parent=1 // pred_check_branch
      %1725 = sbr.rel (0) target = $region57
    $region56: #{tpu_custom_call.1} parent=1 // pred_region
      %1726 = dma.done [#allocation5], 128
    $region57: #{tpu_custom_call.1} parent=1 // pred_fallthru
      _
    %1727 = vsyncpa [#allocation4], 1
    %1728 = vsyncpa [#allocation7], 1
    %1729 = vsyncpa [#allocation10], 1
    %1730 = vsyncpa [#allocation5], 1

</llo_original>
